<compile_context>
chip_gen: v6e
topology: v6e:2x2x1
jax: 0.10.0
libtpu: 0.0.40
codegen_flags: <defaults>
</compile_context>

<pallas_src>
import functools

import jax
import jax.numpy as jnp
import numpy as np
from jax import lax
from jax.experimental import pallas as pl
from jax.experimental.pallas import tpu as pltpu

LN_EPS = 1e-5


def _layernorm(x, gamma, beta):
    mean = jnp.mean(x, axis=-1, keepdims=True)
    var = jnp.mean(jnp.square(x - mean), axis=-1, keepdims=True)
    return (x - mean) * lax.rsqrt(var + LN_EPS) * gamma + beta


def _gelu(x):
    # TODO(synk): PyTorch nn.GELU() is the exact erf GELU; tanh approximation is
    # used since erf lowering under Mosaic is not guaranteed (matches the JAX
    # reference below; ~1e-3-level deviation from the PyTorch module).
    c = jnp.float32(0.7978845608028654)  # sqrt(2/pi)
    return 0.5 * x * (1.0 + jnp.tanh(c * (x + 0.044715 * x * x * x)))


def _mm(a, b, dtype):
    """Plain 2-D matmul, f32 accumulation; operands optionally cast to bf16."""
    return jnp.dot(a.astype(dtype), b.astype(dtype),
                   preferred_element_type=jnp.float32)


def transformer_v1_kernel(q_ref, k_ref, v_ref,
                          gamma_ref, beta_ref,
                          wq_ref, wk_ref, wv_ref,
                          wo_ref, bo_ref,
                          w1_ref, b1_ref, w2_ref, b2_ref,
                          o_ref, *, bb, heads, dim_head, matmul_dtype):
    q3 = q_ref[...]                      # (bb, n, dim)
    k3 = k_ref[...]                      # (bb, nk, dim)
    v3 = v_ref[...]                      # (bb, nk, dim)
    n, dim = q3.shape[1], q3.shape[2]
    nk = k3.shape[1]
    inner = heads * dim_head

    gamma = gamma_ref[...]               # (1, dim)
    beta = beta_ref[...]                 # (1, dim)

    # Flatten (batch, seq) into the matmul M axis.  n == 8 (a full sublane
    # tile) so these reshapes are layout no-ops (no relayout copies).
    q2 = q3.reshape(bb * n, dim)
    k2 = k3.reshape(bb * nk, dim)
    v2 = v3.reshape(bb * nk, dim)

    # Shared pre-norm LayerNorm applied to q, k, v.
    qn = _layernorm(q2, gamma, beta)
    kn = _layernorm(k2, gamma, beta)
    vn = _layernorm(v2, gamma, beta)

    # QKV projections: one 2-D matmul each against the fused (dim, inner)
    # weights (1/sqrt(dim_head) already folded into Wq in the wrapper).
    qp = _mm(qn, wq_ref[...], matmul_dtype)          # (bb*n,  inner)
    kp = _mm(kn, wk_ref[...], matmul_dtype)          # (bb*nk, inner)
    vp = _mm(vn, wv_ref[...], matmul_dtype)          # (bb*nk, inner)

    qp3 = qp.reshape(bb, n, inner)
    kp3 = kp.reshape(bb, nk, inner)
    vp3 = vp.reshape(bb, nk, inner)

    # Per-head attention: static lane slices only where the scores contraction
    # needs per-head structure; contractions batched over bb (heads unrolled).
    head_outs = []
    for h in range(heads):
        lo, hi = h * dim_head, (h + 1) * dim_head
        q_h = qp3[:, :, lo:hi]                       # (bb, n,  dh)
        k_h = kp3[:, :, lo:hi]                       # (bb, nk, dh)
        v_h = vp3[:, :, lo:hi]                       # (bb, nk, dh)

        # Q . K^T as a contraction over the last dims (no materialized .T).
        scores = lax.dot_general(
            q_h.astype(matmul_dtype), k_h.astype(matmul_dtype),
            dimension_numbers=(((2,), (2,)), ((0,), (0,))),
            preferred_element_type=jnp.float32)      # (bb, n, nk)

        scores = scores - jnp.max(scores, axis=-1, keepdims=True)
        e = jnp.exp(scores)
        denom = jnp.sum(e, axis=-1, keepdims=True)
        attn = e * pl.reciprocal(denom, approx=False)  # softmax

        out_h = lax.dot_general(
            attn.astype(matmul_dtype), v_h.astype(matmul_dtype),
            dimension_numbers=(((2,), (1,)), ((0,), (0,))),
            preferred_element_type=jnp.float32)      # (bb, n, dh)
        head_outs.append(out_h)

    # Concatenate heads along lanes and apply the original Wo with ONE 2-D
    # matmul (replaces per-head Wo pushes + cross-head reduce).
    out_cat = jnp.concatenate(head_outs, axis=-1)    # (bb, n, inner)
    out2 = out_cat.reshape(bb * n, inner)
    attn_out = _mm(out2, wo_ref[...], matmul_dtype) + bo_ref[...]

    # Residual with the ORIGINAL (pre-norm) q.
    x = attn_out + q2                                # (bb*n, dim)

    # FeedForward (Linear -> GELU -> Linear) + residual, plain 2-D matmuls
    # (no weight broadcast over the batch).
    h1 = _gelu(_mm(x, w1_ref[...], matmul_dtype) + b1_ref[...])   # (bb*n, mlp)
    ff = _mm(h1, w2_ref[...], matmul_dtype) + b2_ref[...]         # (bb*n, dim)
    y = ff + x                                       # (bb*n, dim)

    # Lane-dense store: assemble the (bb, n*dim) output slab (multiple of 128
    # lanes) in-register instead of storing 32-lane masked rows.
    y3 = y.reshape(bb, n, dim)
    o_ref[...] = jnp.concatenate([y3[:, j, :] for j in range(n)], axis=-1)


def transformer_v1(q, k, v, params, *, heads, dim_head,
                   batch_per_step=None, use_bf16_matmul=False):
    b, n, dim = q.shape
    bk, nk, _ = k.shape
    assert bk == b, "einsum 'b h i d, b h j d' requires matching batch dims"
    inner = heads * dim_head
    mlp = params["w1"].shape[1]
    scale = float(dim_head) ** -0.5

    # Fold the attention scale into Wq once (weight transform, not input scale).
    wq = params["wq"] * scale
    wk, wv, wo = params["wk"], params["wv"], params["wo"]
    w1, w2 = params["w1"], params["w2"]

    matmul_dtype = jnp.bfloat16 if use_bf16_matmul else jnp.float32
    if use_bf16_matmul:
        # v6e/v7x: bf16 MXU operands with f32 accumulation (halves weight
        # traffic).  Off by default to hold the 1e-4 f32 tolerance check.
        wq, wk, wv, wo, w1, w2 = (w.astype(jnp.bfloat16)
                                  for w in (wq, wk, wv, wo, w1, w2))

    # Whole batch in one grid step by default: amortizes the ~0.35us/step
    # pipeline overhead and DMAs every weight exactly once (no per-core
    # duplication).  Override batch_per_step only when per-element compute is
    # large enough to be compute-bound.
    if batch_per_step is None or b % batch_per_step != 0:
        batch_per_step = b
    bb = batch_per_step
    grid = (b // bb,)

    kernel = functools.partial(transformer_v1_kernel, bb=bb, heads=heads,
                               dim_head=dim_head, matmul_dtype=matmul_dtype)

    def const_spec(shape):
        return pl.BlockSpec(shape, lambda i, _nd=len(shape): (0,) * _nd)

    in_specs = [
        pl.BlockSpec((bb, n, dim), lambda i: (i, 0, 0)),    # q
        pl.BlockSpec((bb, nk, dim), lambda i: (i, 0, 0)),   # k
        pl.BlockSpec((bb, nk, dim), lambda i: (i, 0, 0)),   # v
        const_spec((1, dim)), const_spec((1, dim)),         # LN gamma, beta
        const_spec((dim, inner)),                           # Wq (scale folded)
        const_spec((dim, inner)),                           # Wk
        const_spec((dim, inner)),                           # Wv
        const_spec((inner, dim)), const_spec((1, dim)),     # Wo, bo
        const_spec((dim, mlp)), const_spec((1, mlp)),       # W1, b1
        const_spec((mlp, dim)), const_spec((1, dim)),       # W2, b2
    ]
    # TODO(synk): when scaling dim/mlp up on v7x (64 MiB VMEM), add
    # pipeline_mode=pl.Buffered(1) on the constant-index weight specs and set
    # vmem_limit_bytes; with grid=(1,) each block is fetched once so it is a
    # no-op at these shapes.

    semantics = ("arbitrary",) if grid[0] == 1 else ("parallel",)

    out_flat = pl.pallas_call(
        kernel,
        out_shape=jax.ShapeDtypeStruct((b, n * dim), jnp.float32),
        grid=grid,
        in_specs=in_specs,
        out_specs=pl.BlockSpec((bb, n * dim), lambda i: (i, 0)),
        compiler_params=pltpu.CompilerParams(dimension_semantics=semantics),
    )(q, k, v,
      params["gamma"], params["beta"],
      wq, wk, wv, wo, params["bo"],
      w1, params["b1"], w2, params["b2"])

    # Wrapper-side layout plumbing back to the logical (b, n, dim) shape.
    return out_flat.reshape(b, n, dim)


def transformer_v1_ref(q, k, v, params, *, heads, dim_head):
    """Pure-JAX reference (same math, no Pallas) for verification."""
    gamma = params["gamma"]
    beta = params["beta"]

    def ln(x):
        m = jnp.mean(x, axis=-1, keepdims=True)
        var = jnp.mean(jnp.square(x - m), axis=-1, keepdims=True)
        return (x - m) * lax.rsqrt(var + LN_EPS) * gamma + beta

    scale = float(dim_head) ** -0.5
    qp = ln(q) @ params["wq"]
    kp = ln(k) @ params["wk"]
    vp = ln(v) @ params["wv"]
    b, n, _ = q.shape
    nk = k.shape[1]
    qh = qp.reshape(b, n, heads, dim_head).transpose(0, 2, 1, 3)
    kh = kp.reshape(b, nk, heads, dim_head).transpose(0, 2, 1, 3)
    vh = vp.reshape(b, nk, heads, dim_head).transpose(0, 2, 1, 3)
    dots = jnp.einsum("bhid,bhjd->bhij", qh, kh) * scale
    attn = jax.nn.softmax(dots, axis=-1)
    out = jnp.einsum("bhij,bhjd->bhid", attn, vh)
    out = out.transpose(0, 2, 1, 3).reshape(b, n, heads * dim_head)
    x = out @ params["wo"] + params["bo"] + q
    hdn = _gelu(x @ params["w1"] + params["b1"])
    return hdn @ params["w2"] + params["b2"] + x


if __name__ == "__main__":
    # Small, module-consistent shapes: batch=2, seq=8, dim=32, heads=4,
    # dim_head=8 (inner=32), mlp_dim=32.
    B, N, NK, DIM = 2, 8, 8, 32
    HEADS, DIM_HEAD = 4, 8
    INNER = HEADS * DIM_HEAD
    MLP = 32

    key = jax.random.PRNGKey(0)
    keys = jax.random.split(key, 12)

    q = jax.random.normal(keys[0], (B, N, DIM), jnp.float32)
    k = jax.random.normal(keys[1], (B, NK, DIM), jnp.float32)
    v = jax.random.normal(keys[2], (B, NK, DIM), jnp.float32)

    s = 0.05
    params = {
        "gamma": jnp.ones((1, DIM), jnp.float32),
        "beta": jnp.zeros((1, DIM), jnp.float32),
        "wq": s * jax.random.normal(keys[3], (DIM, INNER), jnp.float32),
        "wk": s * jax.random.normal(keys[4], (DIM, INNER), jnp.float32),
        "wv": s * jax.random.normal(keys[5], (DIM, INNER), jnp.float32),
        "wo": s * jax.random.normal(keys[6], (INNER, DIM), jnp.float32),
        "bo": s * jax.random.normal(keys[7], (1, DIM), jnp.float32),
        "w1": s * jax.random.normal(keys[8], (DIM, MLP), jnp.float32),
        "b1": s * jax.random.normal(keys[9], (1, MLP), jnp.float32),
        "w2": s * jax.random.normal(keys[10], (MLP, DIM), jnp.float32),
        "b2": s * jax.random.normal(keys[11], (1, DIM), jnp.float32),
    }

    out = transformer_v1(q, k, v, params, heads=HEADS, dim_head=DIM_HEAD)
    out = jax.block_until_ready(out)

    # Run the pure-JAX reference at full f32 matmul precision so the 1e-4
    # comparison is against accurate math (default TPU matmul precision is
    # bf16-pass and would dominate the error budget).
    with jax.default_matmul_precision("highest"):
        ref = jax.block_until_ready(
            transformer_v1_ref(q, k, v, params, heads=HEADS, dim_head=DIM_HEAD))

    np.testing.assert_allclose(np.asarray(out), np.asarray(ref),
                               rtol=1e-4, atol=1e-4)
    print("KERNEL_OK")
</pallas_src>

<mosaic_0001>
module attributes {stable_mosaic.version = 11 : i64} {
  func.func @transformer_v1_kernel(%arg0: i32, %arg1: memref<2x8x32xf32, #tpu.memory_space<vmem>>, %arg2: memref<2x8x32xf32, #tpu.memory_space<vmem>>, %arg3: memref<2x8x32xf32, #tpu.memory_space<vmem>>, %arg4: memref<1x32xf32, #tpu.memory_space<vmem>>, %arg5: memref<1x32xf32, #tpu.memory_space<vmem>>, %arg6: memref<32x32xf32, #tpu.memory_space<vmem>>, %arg7: memref<32x32xf32, #tpu.memory_space<vmem>>, %arg8: memref<32x32xf32, #tpu.memory_space<vmem>>, %arg9: memref<32x32xf32, #tpu.memory_space<vmem>>, %arg10: memref<1x32xf32, #tpu.memory_space<vmem>>, %arg11: memref<32x32xf32, #tpu.memory_space<vmem>>, %arg12: memref<1x32xf32, #tpu.memory_space<vmem>>, %arg13: memref<32x32xf32, #tpu.memory_space<vmem>>, %arg14: memref<1x32xf32, #tpu.memory_space<vmem>>, %arg15: memref<2x256xf32, #tpu.memory_space<vmem>>) attributes {dimension_semantics = [#tpu.dimension_semantics<arbitrary>], iteration_bounds = array<i64: 1>, scalar_prefetch = 0 : i64, scratch_operands = 0 : i64, tpu.core_type = #tpu.core_type<tc>, window_params = [{transform_indices = @transform_0, window_bounds = array<i64: 2, 8, 32>}, {transform_indices = @transform_1, window_bounds = array<i64: 2, 8, 32>}, {transform_indices = @transform_2, window_bounds = array<i64: 2, 8, 32>}, {pipeline_mode = #tpu.pipeline_mode<synchronous>, transform_indices = @transform_3, window_bounds = array<i64: 1, 32>}, {pipeline_mode = #tpu.pipeline_mode<synchronous>, transform_indices = @transform_4, window_bounds = array<i64: 1, 32>}, {pipeline_mode = #tpu.pipeline_mode<synchronous>, transform_indices = @transform_5, window_bounds = array<i64: 32, 32>}, {pipeline_mode = #tpu.pipeline_mode<synchronous>, transform_indices = @transform_6, window_bounds = array<i64: 32, 32>}, {pipeline_mode = #tpu.pipeline_mode<synchronous>, transform_indices = @transform_7, window_bounds = array<i64: 32, 32>}, {pipeline_mode = #tpu.pipeline_mode<synchronous>, transform_indices = @transform_8, window_bounds = array<i64: 32, 32>}, {pipeline_mode = #tpu.pipeline_mode<synchronous>, transform_indices = @transform_9, window_bounds = array<i64: 1, 32>}, {pipeline_mode = #tpu.pipeline_mode<synchronous>, transform_indices = @transform_10, window_bounds = array<i64: 32, 32>}, {pipeline_mode = #tpu.pipeline_mode<synchronous>, transform_indices = @transform_11, window_bounds = array<i64: 1, 32>}, {pipeline_mode = #tpu.pipeline_mode<synchronous>, transform_indices = @transform_12, window_bounds = array<i64: 32, 32>}, {pipeline_mode = #tpu.pipeline_mode<synchronous>, transform_indices = @transform_13, window_bounds = array<i64: 1, 32>}, {transform_indices = @transform_14, window_bounds = array<i64: 2, 256>}]} {
    %c0 = arith.constant 0 : index
    %c0_0 = arith.constant 0 : index
    %c0_1 = arith.constant 0 : index
    %0 = vector.load %arg1[%c0, %c0_0, %c0_1] : memref<2x8x32xf32, #tpu.memory_space<vmem>>, vector<2x8x32xf32>
    %c0_2 = arith.constant 0 : index
    %c0_3 = arith.constant 0 : index
    %c0_4 = arith.constant 0 : index
    %1 = vector.load %arg2[%c0_2, %c0_3, %c0_4] : memref<2x8x32xf32, #tpu.memory_space<vmem>>, vector<2x8x32xf32>
    %c0_5 = arith.constant 0 : index
    %c0_6 = arith.constant 0 : index
    %c0_7 = arith.constant 0 : index
    %2 = vector.load %arg3[%c0_5, %c0_6, %c0_7] : memref<2x8x32xf32, #tpu.memory_space<vmem>>, vector<2x8x32xf32>
    %c0_8 = arith.constant 0 : index
    %c0_9 = arith.constant 0 : index
    %3 = vector.load %arg4[%c0_8, %c0_9] : memref<1x32xf32, #tpu.memory_space<vmem>>, vector<1x32xf32>
    %c0_10 = arith.constant 0 : index
    %c0_11 = arith.constant 0 : index
    %4 = vector.load %arg5[%c0_10, %c0_11] : memref<1x32xf32, #tpu.memory_space<vmem>>, vector<1x32xf32>
    %5 = vector.shape_cast %0 : vector<2x8x32xf32> to vector<16x32xf32>
    %6 = vector.shape_cast %1 : vector<2x8x32xf32> to vector<16x32xf32>
    %7 = vector.shape_cast %2 : vector<2x8x32xf32> to vector<16x32xf32>
    %cst = arith.constant dense<0.000000e+00> : vector<16xf32>
    %8 = vector.multi_reduction <add>, %5, %cst [1] : vector<16x32xf32> to vector<16xf32>
    %9 = vector.shape_cast %8 : vector<16xf32> to vector<16x1xf32>
    %cst_12 = arith.constant 3.200000e+01 : f32
    %10 = vector.broadcast %cst_12 : f32 to vector<16x1xf32>
    %11 = arith.divf %9, %10 : vector<16x1xf32>
    %12 = vector.broadcast %11 : vector<16x1xf32> to vector<16x32xf32>
    %13 = arith.subf %5, %12 : vector<16x32xf32>
    %14 = arith.mulf %13, %13 : vector<16x32xf32>
    %cst_13 = arith.constant dense<0.000000e+00> : vector<16xf32>
    %15 = vector.multi_reduction <add>, %14, %cst_13 [1] : vector<16x32xf32> to vector<16xf32>
    %16 = vector.shape_cast %15 : vector<16xf32> to vector<16x1xf32>
    %cst_14 = arith.constant 3.200000e+01 : f32
    %17 = vector.broadcast %cst_14 : f32 to vector<16x1xf32>
    %18 = arith.divf %16, %17 : vector<16x1xf32>
    %19 = vector.broadcast %11 : vector<16x1xf32> to vector<16x32xf32>
    %20 = arith.subf %5, %19 : vector<16x32xf32>
    %cst_15 = arith.constant 9.99999974E-6 : f32
    %21 = vector.broadcast %cst_15 : f32 to vector<16x1xf32>
    %22 = arith.addf %18, %21 : vector<16x1xf32>
    %23 = math.rsqrt %22 : vector<16x1xf32>
    %24 = vector.broadcast %23 : vector<16x1xf32> to vector<16x32xf32>
    %25 = arith.mulf %20, %24 : vector<16x32xf32>
    %26 = vector.broadcast %3 : vector<1x32xf32> to vector<16x32xf32>
    %27 = arith.mulf %25, %26 : vector<16x32xf32>
    %28 = vector.broadcast %4 : vector<1x32xf32> to vector<16x32xf32>
    %29 = arith.addf %27, %28 : vector<16x32xf32>
    %cst_16 = arith.constant dense<0.000000e+00> : vector<16xf32>
    %30 = vector.multi_reduction <add>, %6, %cst_16 [1] : vector<16x32xf32> to vector<16xf32>
    %31 = vector.shape_cast %30 : vector<16xf32> to vector<16x1xf32>
    %cst_17 = arith.constant 3.200000e+01 : f32
    %32 = vector.broadcast %cst_17 : f32 to vector<16x1xf32>
    %33 = arith.divf %31, %32 : vector<16x1xf32>
    %34 = vector.broadcast %33 : vector<16x1xf32> to vector<16x32xf32>
    %35 = arith.subf %6, %34 : vector<16x32xf32>
    %36 = arith.mulf %35, %35 : vector<16x32xf32>
    %cst_18 = arith.constant dense<0.000000e+00> : vector<16xf32>
    %37 = vector.multi_reduction <add>, %36, %cst_18 [1] : vector<16x32xf32> to vector<16xf32>
    %38 = vector.shape_cast %37 : vector<16xf32> to vector<16x1xf32>
    %cst_19 = arith.constant 3.200000e+01 : f32
    %39 = vector.broadcast %cst_19 : f32 to vector<16x1xf32>
    %40 = arith.divf %38, %39 : vector<16x1xf32>
    %41 = vector.broadcast %33 : vector<16x1xf32> to vector<16x32xf32>
    %42 = arith.subf %6, %41 : vector<16x32xf32>
    %cst_20 = arith.constant 9.99999974E-6 : f32
    %43 = vector.broadcast %cst_20 : f32 to vector<16x1xf32>
    %44 = arith.addf %40, %43 : vector<16x1xf32>
    %45 = math.rsqrt %44 : vector<16x1xf32>
    %46 = vector.broadcast %45 : vector<16x1xf32> to vector<16x32xf32>
    %47 = arith.mulf %42, %46 : vector<16x32xf32>
    %48 = vector.broadcast %3 : vector<1x32xf32> to vector<16x32xf32>
    %49 = arith.mulf %47, %48 : vector<16x32xf32>
    %50 = vector.broadcast %4 : vector<1x32xf32> to vector<16x32xf32>
    %51 = arith.addf %49, %50 : vector<16x32xf32>
    %cst_21 = arith.constant dense<0.000000e+00> : vector<16xf32>
    %52 = vector.multi_reduction <add>, %7, %cst_21 [1] : vector<16x32xf32> to vector<16xf32>
    %53 = vector.shape_cast %52 : vector<16xf32> to vector<16x1xf32>
    %cst_22 = arith.constant 3.200000e+01 : f32
    %54 = vector.broadcast %cst_22 : f32 to vector<16x1xf32>
    %55 = arith.divf %53, %54 : vector<16x1xf32>
    %56 = vector.broadcast %55 : vector<16x1xf32> to vector<16x32xf32>
    %57 = arith.subf %7, %56 : vector<16x32xf32>
    %58 = arith.mulf %57, %57 : vector<16x32xf32>
    %cst_23 = arith.constant dense<0.000000e+00> : vector<16xf32>
    %59 = vector.multi_reduction <add>, %58, %cst_23 [1] : vector<16x32xf32> to vector<16xf32>
    %60 = vector.shape_cast %59 : vector<16xf32> to vector<16x1xf32>
    %cst_24 = arith.constant 3.200000e+01 : f32
    %61 = vector.broadcast %cst_24 : f32 to vector<16x1xf32>
    %62 = arith.divf %60, %61 : vector<16x1xf32>
    %63 = vector.broadcast %55 : vector<16x1xf32> to vector<16x32xf32>
    %64 = arith.subf %7, %63 : vector<16x32xf32>
    %cst_25 = arith.constant 9.99999974E-6 : f32
    %65 = vector.broadcast %cst_25 : f32 to vector<16x1xf32>
    %66 = arith.addf %62, %65 : vector<16x1xf32>
    %67 = math.rsqrt %66 : vector<16x1xf32>
    %68 = vector.broadcast %67 : vector<16x1xf32> to vector<16x32xf32>
    %69 = arith.mulf %64, %68 : vector<16x32xf32>
    %70 = vector.broadcast %3 : vector<1x32xf32> to vector<16x32xf32>
    %71 = arith.mulf %69, %70 : vector<16x32xf32>
    %72 = vector.broadcast %4 : vector<1x32xf32> to vector<16x32xf32>
    %73 = arith.addf %71, %72 : vector<16x32xf32>
    %c0_26 = arith.constant 0 : index
    %c0_27 = arith.constant 0 : index
    %74 = vector.load %arg6[%c0_26, %c0_27] : memref<32x32xf32, #tpu.memory_space<vmem>>, vector<32x32xf32>
    %cst_28 = arith.constant dense<0.000000e+00> : vector<16x32xf32>
    %75 = tpu.matmul %29, %74, %cst_28 {dimension_numbers = #tpu.dot_dimension_numbers<[1], [0], [0], [1], [0, 0, 1, 1], [], []>} : vector<16x32xf32>, vector<32x32xf32>, vector<16x32xf32> -> vector<16x32xf32>
    %c0_29 = arith.constant 0 : index
    %c0_30 = arith.constant 0 : index
    %76 = vector.load %arg7[%c0_29, %c0_30] : memref<32x32xf32, #tpu.memory_space<vmem>>, vector<32x32xf32>
    %cst_31 = arith.constant dense<0.000000e+00> : vector<16x32xf32>
    %77 = tpu.matmul %51, %76, %cst_31 {dimension_numbers = #tpu.dot_dimension_numbers<[1], [0], [0], [1], [0, 0, 1, 1], [], []>} : vector<16x32xf32>, vector<32x32xf32>, vector<16x32xf32> -> vector<16x32xf32>
    %c0_32 = arith.constant 0 : index
    %c0_33 = arith.constant 0 : index
    %78 = vector.load %arg8[%c0_32, %c0_33] : memref<32x32xf32, #tpu.memory_space<vmem>>, vector<32x32xf32>
    %cst_34 = arith.constant dense<0.000000e+00> : vector<16x32xf32>
    %79 = tpu.matmul %73, %78, %cst_34 {dimension_numbers = #tpu.dot_dimension_numbers<[1], [0], [0], [1], [0, 0, 1, 1], [], []>} : vector<16x32xf32>, vector<32x32xf32>, vector<16x32xf32> -> vector<16x32xf32>
    %80 = vector.shape_cast %75 : vector<16x32xf32> to vector<2x8x32xf32>
    %81 = vector.shape_cast %77 : vector<16x32xf32> to vector<2x8x32xf32>
    %82 = vector.shape_cast %79 : vector<16x32xf32> to vector<2x8x32xf32>
    %83 = vector.extract_strided_slice %80 {offsets = [0, 0, 0], sizes = [2, 8, 8], strides = [1, 1, 1]} : vector<2x8x32xf32> to vector<2x8x8xf32>
    %84 = vector.extract_strided_slice %81 {offsets = [0, 0, 0], sizes = [2, 8, 8], strides = [1, 1, 1]} : vector<2x8x32xf32> to vector<2x8x8xf32>
    %85 = vector.extract_strided_slice %82 {offsets = [0, 0, 0], sizes = [2, 8, 8], strides = [1, 1, 1]} : vector<2x8x32xf32> to vector<2x8x8xf32>
    %cst_35 = arith.constant dense<0.000000e+00> : vector<2x8x8xf32>
    %86 = tpu.matmul %83, %84, %cst_35 {dimension_numbers = #tpu.dot_dimension_numbers<[2], [2], [1], [1], [0, 0, 0, 1, 1, 1], [0], [0]>} : vector<2x8x8xf32>, vector<2x8x8xf32>, vector<2x8x8xf32> -> vector<2x8x8xf32>
    %cst_36 = arith.constant dense<0xFF800000> : vector<2x8xf32>
    %87 = vector.multi_reduction <maximumf>, %86, %cst_36 [2] : vector<2x8x8xf32> to vector<2x8xf32>
    %88 = vector.shape_cast %87 : vector<2x8xf32> to vector<2x8x1xf32>
    %89 = vector.broadcast %88 : vector<2x8x1xf32> to vector<2x8x8xf32>
    %90 = arith.subf %86, %89 : vector<2x8x8xf32>
    %91 = math.exp %90 : vector<2x8x8xf32>
    %cst_37 = arith.constant dense<0.000000e+00> : vector<2x8xf32>
    %92 = vector.multi_reduction <add>, %91, %cst_37 [2] : vector<2x8x8xf32> to vector<2x8xf32>
    %93 = vector.shape_cast %92 : vector<2x8xf32> to vector<2x8x1xf32>
    %94 = tpu.reciprocal %93 : vector<2x8x1xf32> -> vector<2x8x1xf32>
    %95 = vector.broadcast %94 : vector<2x8x1xf32> to vector<2x8x8xf32>
    %96 = arith.mulf %91, %95 : vector<2x8x8xf32>
    %cst_38 = arith.constant dense<0.000000e+00> : vector<2x8x8xf32>
    %97 = tpu.matmul %96, %85, %cst_38 {dimension_numbers = #tpu.dot_dimension_numbers<[2], [1], [1], [2], [0, 0, 0, 1, 1, 2], [0], [0]>} : vector<2x8x8xf32>, vector<2x8x8xf32>, vector<2x8x8xf32> -> vector<2x8x8xf32>
    %98 = vector.extract_strided_slice %80 {offsets = [0, 0, 8], sizes = [2, 8, 8], strides = [1, 1, 1]} : vector<2x8x32xf32> to vector<2x8x8xf32>
    %99 = vector.extract_strided_slice %81 {offsets = [0, 0, 8], sizes = [2, 8, 8], strides = [1, 1, 1]} : vector<2x8x32xf32> to vector<2x8x8xf32>
    %100 = vector.extract_strided_slice %82 {offsets = [0, 0, 8], sizes = [2, 8, 8], strides = [1, 1, 1]} : vector<2x8x32xf32> to vector<2x8x8xf32>
    %cst_39 = arith.constant dense<0.000000e+00> : vector<2x8x8xf32>
    %101 = tpu.matmul %98, %99, %cst_39 {dimension_numbers = #tpu.dot_dimension_numbers<[2], [2], [1], [1], [0, 0, 0, 1, 1, 1], [0], [0]>} : vector<2x8x8xf32>, vector<2x8x8xf32>, vector<2x8x8xf32> -> vector<2x8x8xf32>
    %cst_40 = arith.constant dense<0xFF800000> : vector<2x8xf32>
    %102 = vector.multi_reduction <maximumf>, %101, %cst_40 [2] : vector<2x8x8xf32> to vector<2x8xf32>
    %103 = vector.shape_cast %102 : vector<2x8xf32> to vector<2x8x1xf32>
    %104 = vector.broadcast %103 : vector<2x8x1xf32> to vector<2x8x8xf32>
    %105 = arith.subf %101, %104 : vector<2x8x8xf32>
    %106 = math.exp %105 : vector<2x8x8xf32>
    %cst_41 = arith.constant dense<0.000000e+00> : vector<2x8xf32>
    %107 = vector.multi_reduction <add>, %106, %cst_41 [2] : vector<2x8x8xf32> to vector<2x8xf32>
    %108 = vector.shape_cast %107 : vector<2x8xf32> to vector<2x8x1xf32>
    %109 = tpu.reciprocal %108 : vector<2x8x1xf32> -> vector<2x8x1xf32>
    %110 = vector.broadcast %109 : vector<2x8x1xf32> to vector<2x8x8xf32>
    %111 = arith.mulf %106, %110 : vector<2x8x8xf32>
    %cst_42 = arith.constant dense<0.000000e+00> : vector<2x8x8xf32>
    %112 = tpu.matmul %111, %100, %cst_42 {dimension_numbers = #tpu.dot_dimension_numbers<[2], [1], [1], [2], [0, 0, 0, 1, 1, 2], [0], [0]>} : vector<2x8x8xf32>, vector<2x8x8xf32>, vector<2x8x8xf32> -> vector<2x8x8xf32>
    %113 = vector.extract_strided_slice %80 {offsets = [0, 0, 16], sizes = [2, 8, 8], strides = [1, 1, 1]} : vector<2x8x32xf32> to vector<2x8x8xf32>
    %114 = vector.extract_strided_slice %81 {offsets = [0, 0, 16], sizes = [2, 8, 8], strides = [1, 1, 1]} : vector<2x8x32xf32> to vector<2x8x8xf32>
    %115 = vector.extract_strided_slice %82 {offsets = [0, 0, 16], sizes = [2, 8, 8], strides = [1, 1, 1]} : vector<2x8x32xf32> to vector<2x8x8xf32>
    %cst_43 = arith.constant dense<0.000000e+00> : vector<2x8x8xf32>
    %116 = tpu.matmul %113, %114, %cst_43 {dimension_numbers = #tpu.dot_dimension_numbers<[2], [2], [1], [1], [0, 0, 0, 1, 1, 1], [0], [0]>} : vector<2x8x8xf32>, vector<2x8x8xf32>, vector<2x8x8xf32> -> vector<2x8x8xf32>
    %cst_44 = arith.constant dense<0xFF800000> : vector<2x8xf32>
    %117 = vector.multi_reduction <maximumf>, %116, %cst_44 [2] : vector<2x8x8xf32> to vector<2x8xf32>
    %118 = vector.shape_cast %117 : vector<2x8xf32> to vector<2x8x1xf32>
    %119 = vector.broadcast %118 : vector<2x8x1xf32> to vector<2x8x8xf32>
    %120 = arith.subf %116, %119 : vector<2x8x8xf32>
    %121 = math.exp %120 : vector<2x8x8xf32>
    %cst_45 = arith.constant dense<0.000000e+00> : vector<2x8xf32>
    %122 = vector.multi_reduction <add>, %121, %cst_45 [2] : vector<2x8x8xf32> to vector<2x8xf32>
    %123 = vector.shape_cast %122 : vector<2x8xf32> to vector<2x8x1xf32>
    %124 = tpu.reciprocal %123 : vector<2x8x1xf32> -> vector<2x8x1xf32>
    %125 = vector.broadcast %124 : vector<2x8x1xf32> to vector<2x8x8xf32>
    %126 = arith.mulf %121, %125 : vector<2x8x8xf32>
    %cst_46 = arith.constant dense<0.000000e+00> : vector<2x8x8xf32>
    %127 = tpu.matmul %126, %115, %cst_46 {dimension_numbers = #tpu.dot_dimension_numbers<[2], [1], [1], [2], [0, 0, 0, 1, 1, 2], [0], [0]>} : vector<2x8x8xf32>, vector<2x8x8xf32>, vector<2x8x8xf32> -> vector<2x8x8xf32>
    %128 = vector.extract_strided_slice %80 {offsets = [0, 0, 24], sizes = [2, 8, 8], strides = [1, 1, 1]} : vector<2x8x32xf32> to vector<2x8x8xf32>
    %129 = vector.extract_strided_slice %81 {offsets = [0, 0, 24], sizes = [2, 8, 8], strides = [1, 1, 1]} : vector<2x8x32xf32> to vector<2x8x8xf32>
    %130 = vector.extract_strided_slice %82 {offsets = [0, 0, 24], sizes = [2, 8, 8], strides = [1, 1, 1]} : vector<2x8x32xf32> to vector<2x8x8xf32>
    %cst_47 = arith.constant dense<0.000000e+00> : vector<2x8x8xf32>
    %131 = tpu.matmul %128, %129, %cst_47 {dimension_numbers = #tpu.dot_dimension_numbers<[2], [2], [1], [1], [0, 0, 0, 1, 1, 1], [0], [0]>} : vector<2x8x8xf32>, vector<2x8x8xf32>, vector<2x8x8xf32> -> vector<2x8x8xf32>
    %cst_48 = arith.constant dense<0xFF800000> : vector<2x8xf32>
    %132 = vector.multi_reduction <maximumf>, %131, %cst_48 [2] : vector<2x8x8xf32> to vector<2x8xf32>
    %133 = vector.shape_cast %132 : vector<2x8xf32> to vector<2x8x1xf32>
    %134 = vector.broadcast %133 : vector<2x8x1xf32> to vector<2x8x8xf32>
    %135 = arith.subf %131, %134 : vector<2x8x8xf32>
    %136 = math.exp %135 : vector<2x8x8xf32>
    %cst_49 = arith.constant dense<0.000000e+00> : vector<2x8xf32>
    %137 = vector.multi_reduction <add>, %136, %cst_49 [2] : vector<2x8x8xf32> to vector<2x8xf32>
    %138 = vector.shape_cast %137 : vector<2x8xf32> to vector<2x8x1xf32>
    %139 = tpu.reciprocal %138 : vector<2x8x1xf32> -> vector<2x8x1xf32>
    %140 = vector.broadcast %139 : vector<2x8x1xf32> to vector<2x8x8xf32>
    %141 = arith.mulf %136, %140 : vector<2x8x8xf32>
    %cst_50 = arith.constant dense<0.000000e+00> : vector<2x8x8xf32>
    %142 = tpu.matmul %141, %130, %cst_50 {dimension_numbers = #tpu.dot_dimension_numbers<[2], [1], [1], [2], [0, 0, 0, 1, 1, 2], [0], [0]>} : vector<2x8x8xf32>, vector<2x8x8xf32>, vector<2x8x8xf32> -> vector<2x8x8xf32>
    %143 = tpu.concatenate %97, %112, %127, %142 in 2 : vector<2x8x8xf32>, vector<2x8x8xf32>, vector<2x8x8xf32>, vector<2x8x8xf32> -> vector<2x8x32xf32>
    %144 = vector.shape_cast %143 : vector<2x8x32xf32> to vector<16x32xf32>
    %c0_51 = arith.constant 0 : index
    %c0_52 = arith.constant 0 : index
    %145 = vector.load %arg9[%c0_51, %c0_52] : memref<32x32xf32, #tpu.memory_space<vmem>>, vector<32x32xf32>
    %cst_53 = arith.constant dense<0.000000e+00> : vector<16x32xf32>
    %146 = tpu.matmul %144, %145, %cst_53 {dimension_numbers = #tpu.dot_dimension_numbers<[1], [0], [0], [1], [0, 0, 1, 1], [], []>} : vector<16x32xf32>, vector<32x32xf32>, vector<16x32xf32> -> vector<16x32xf32>
    %c0_54 = arith.constant 0 : index
    %c0_55 = arith.constant 0 : index
    %147 = vector.load %arg10[%c0_54, %c0_55] : memref<1x32xf32, #tpu.memory_space<vmem>>, vector<1x32xf32>
    %148 = vector.broadcast %147 : vector<1x32xf32> to vector<16x32xf32>
    %149 = arith.addf %146, %148 : vector<16x32xf32>
    %150 = arith.addf %149, %5 : vector<16x32xf32>
    %c0_56 = arith.constant 0 : index
    %c0_57 = arith.constant 0 : index
    %151 = vector.load %arg11[%c0_56, %c0_57] : memref<32x32xf32, #tpu.memory_space<vmem>>, vector<32x32xf32>
    %cst_58 = arith.constant dense<0.000000e+00> : vector<16x32xf32>
    %152 = tpu.matmul %150, %151, %cst_58 {dimension_numbers = #tpu.dot_dimension_numbers<[1], [0], [0], [1], [0, 0, 1, 1], [], []>} : vector<16x32xf32>, vector<32x32xf32>, vector<16x32xf32> -> vector<16x32xf32>
    %c0_59 = arith.constant 0 : index
    %c0_60 = arith.constant 0 : index
    %153 = vector.load %arg12[%c0_59, %c0_60] : memref<1x32xf32, #tpu.memory_space<vmem>>, vector<1x32xf32>
    %154 = vector.broadcast %153 : vector<1x32xf32> to vector<16x32xf32>
    %155 = arith.addf %152, %154 : vector<16x32xf32>
    %cst_61 = arith.constant 5.000000e-01 : f32
    %156 = vector.broadcast %cst_61 : f32 to vector<16x32xf32>
    %157 = arith.mulf %156, %155 : vector<16x32xf32>
    %cst_62 = arith.constant 4.471500e-02 : f32
    %158 = vector.broadcast %cst_62 : f32 to vector<16x32xf32>
    %159 = arith.mulf %158, %155 : vector<16x32xf32>
    %160 = arith.mulf %159, %155 : vector<16x32xf32>
    %161 = arith.mulf %160, %155 : vector<16x32xf32>
    %162 = arith.addf %155, %161 : vector<16x32xf32>
    %cst_63 = arith.constant 0.797884583 : f32
    %163 = vector.broadcast %cst_63 : f32 to vector<16x32xf32>
    %164 = arith.mulf %163, %162 : vector<16x32xf32>
    %165 = math.tanh %164 : vector<16x32xf32>
    %cst_64 = arith.constant 1.000000e+00 : f32
    %166 = vector.broadcast %cst_64 : f32 to vector<16x32xf32>
    %167 = arith.addf %166, %165 : vector<16x32xf32>
    %168 = arith.mulf %157, %167 : vector<16x32xf32>
    %c0_65 = arith.constant 0 : index
    %c0_66 = arith.constant 0 : index
    %169 = vector.load %arg13[%c0_65, %c0_66] : memref<32x32xf32, #tpu.memory_space<vmem>>, vector<32x32xf32>
    %cst_67 = arith.constant dense<0.000000e+00> : vector<16x32xf32>
    %170 = tpu.matmul %168, %169, %cst_67 {dimension_numbers = #tpu.dot_dimension_numbers<[1], [0], [0], [1], [0, 0, 1, 1], [], []>} : vector<16x32xf32>, vector<32x32xf32>, vector<16x32xf32> -> vector<16x32xf32>
    %c0_68 = arith.constant 0 : index
    %c0_69 = arith.constant 0 : index
    %171 = vector.load %arg14[%c0_68, %c0_69] : memref<1x32xf32, #tpu.memory_space<vmem>>, vector<1x32xf32>
    %172 = vector.broadcast %171 : vector<1x32xf32> to vector<16x32xf32>
    %173 = arith.addf %170, %172 : vector<16x32xf32>
    %174 = arith.addf %173, %150 : vector<16x32xf32>
    %175 = vector.shape_cast %174 : vector<16x32xf32> to vector<2x8x32xf32>
    %176 = vector.extract_strided_slice %175 {offsets = [0, 0, 0], sizes = [2, 1, 32], strides = [1, 1, 1]} : vector<2x8x32xf32> to vector<2x1x32xf32>
    %177 = vector.shape_cast %176 : vector<2x1x32xf32> to vector<2x32xf32>
    %178 = vector.extract_strided_slice %175 {offsets = [0, 1, 0], sizes = [2, 1, 32], strides = [1, 1, 1]} : vector<2x8x32xf32> to vector<2x1x32xf32>
    %179 = vector.shape_cast %178 : vector<2x1x32xf32> to vector<2x32xf32>
    %180 = vector.extract_strided_slice %175 {offsets = [0, 2, 0], sizes = [2, 1, 32], strides = [1, 1, 1]} : vector<2x8x32xf32> to vector<2x1x32xf32>
    %181 = vector.shape_cast %180 : vector<2x1x32xf32> to vector<2x32xf32>
    %182 = vector.extract_strided_slice %175 {offsets = [0, 3, 0], sizes = [2, 1, 32], strides = [1, 1, 1]} : vector<2x8x32xf32> to vector<2x1x32xf32>
    %183 = vector.shape_cast %182 : vector<2x1x32xf32> to vector<2x32xf32>
    %184 = vector.extract_strided_slice %175 {offsets = [0, 4, 0], sizes = [2, 1, 32], strides = [1, 1, 1]} : vector<2x8x32xf32> to vector<2x1x32xf32>
    %185 = vector.shape_cast %184 : vector<2x1x32xf32> to vector<2x32xf32>
    %186 = vector.extract_strided_slice %175 {offsets = [0, 5, 0], sizes = [2, 1, 32], strides = [1, 1, 1]} : vector<2x8x32xf32> to vector<2x1x32xf32>
    %187 = vector.shape_cast %186 : vector<2x1x32xf32> to vector<2x32xf32>
    %188 = vector.extract_strided_slice %175 {offsets = [0, 6, 0], sizes = [2, 1, 32], strides = [1, 1, 1]} : vector<2x8x32xf32> to vector<2x1x32xf32>
    %189 = vector.shape_cast %188 : vector<2x1x32xf32> to vector<2x32xf32>
    %190 = vector.extract_strided_slice %175 {offsets = [0, 7, 0], sizes = [2, 1, 32], strides = [1, 1, 1]} : vector<2x8x32xf32> to vector<2x1x32xf32>
    %191 = vector.shape_cast %190 : vector<2x1x32xf32> to vector<2x32xf32>
    %192 = tpu.concatenate %177, %179, %181, %183, %185, %187, %189, %191 in 1 : vector<2x32xf32>, vector<2x32xf32>, vector<2x32xf32>, vector<2x32xf32>, vector<2x32xf32>, vector<2x32xf32>, vector<2x32xf32>, vector<2x32xf32> -> vector<2x256xf32>
    %c0_70 = arith.constant 0 : index
    %c0_71 = arith.constant 0 : index
    %193 = vector.load %arg15[%c0_70, %c0_71] : memref<2x256xf32, #tpu.memory_space<vmem>>, vector<2x256xf32>
    tpu.vector_store %arg15[%c0_70, %c0_71], %192 {strides = array<i32>} : memref<2x256xf32, #tpu.memory_space<vmem>>, vector<2x256xf32>,
    return
  }
  func.func @transform_0(%arg0: i32) -> (i32, i32, i32) {
    %c0_i32 = arith.constant 0 : i32
    %c0_i32_0 = arith.constant 0 : i32
    %c0_i32_1 = arith.constant 0 : i32
    return %arg0, %c0_i32, %c0_i32_0 : i32, i32, i32
  }
  func.func @transform_1(%arg0: i32) -> (i32, i32, i32) {
    %c0_i32 = arith.constant 0 : i32
    %c0_i32_0 = arith.constant 0 : i32
    %c0_i32_1 = arith.constant 0 : i32
    return %arg0, %c0_i32, %c0_i32_0 : i32, i32, i32
  }
  func.func @transform_2(%arg0: i32) -> (i32, i32, i32) {
    %c0_i32 = arith.constant 0 : i32
    %c0_i32_0 = arith.constant 0 : i32
    %c0_i32_1 = arith.constant 0 : i32
    return %arg0, %c0_i32, %c0_i32_0 : i32, i32, i32
  }
  func.func @transform_3(%arg0: i32) -> (i32, i32) {
    %c0_i32 = arith.constant 0 : i32
    %c0_i32_0 = arith.constant 0 : i32
    %c0_i32_1 = arith.constant 0 : i32
    return %c0_i32, %c0_i32_0 : i32, i32
  }
  func.func @transform_4(%arg0: i32) -> (i32, i32) {
    %c0_i32 = arith.constant 0 : i32
    %c0_i32_0 = arith.constant 0 : i32
    %c0_i32_1 = arith.constant 0 : i32
    return %c0_i32, %c0_i32_0 : i32, i32
  }
  func.func @transform_5(%arg0: i32) -> (i32, i32) {
    %c0_i32 = arith.constant 0 : i32
    %c0_i32_0 = arith.constant 0 : i32
    %c0_i32_1 = arith.constant 0 : i32
    return %c0_i32, %c0_i32_0 : i32, i32
  }
  func.func @transform_6(%arg0: i32) -> (i32, i32) {
    %c0_i32 = arith.constant 0 : i32
    %c0_i32_0 = arith.constant 0 : i32
    %c0_i32_1 = arith.constant 0 : i32
    return %c0_i32, %c0_i32_0 : i32, i32
  }
  func.func @transform_7(%arg0: i32) -> (i32, i32) {
    %c0_i32 = arith.constant 0 : i32
    %c0_i32_0 = arith.constant 0 : i32
    %c0_i32_1 = arith.constant 0 : i32
    return %c0_i32, %c0_i32_0 : i32, i32
  }
  func.func @transform_8(%arg0: i32) -> (i32, i32) {
    %c0_i32 = arith.constant 0 : i32
    %c0_i32_0 = arith.constant 0 : i32
    %c0_i32_1 = arith.constant 0 : i32
    return %c0_i32, %c0_i32_0 : i32, i32
  }
  func.func @transform_9(%arg0: i32) -> (i32, i32) {
    %c0_i32 = arith.constant 0 : i32
    %c0_i32_0 = arith.constant 0 : i32
    %c0_i32_1 = arith.constant 0 : i32
    return %c0_i32, %c0_i32_0 : i32, i32
  }
  func.func @transform_10(%arg0: i32) -> (i32, i32) {
    %c0_i32 = arith.constant 0 : i32
    %c0_i32_0 = arith.constant 0 : i32
    %c0_i32_1 = arith.constant 0 : i32
    return %c0_i32, %c0_i32_0 : i32, i32
  }
  func.func @transform_11(%arg0: i32) -> (i32, i32) {
    %c0_i32 = arith.constant 0 : i32
    %c0_i32_0 = arith.constant 0 : i32
    %c0_i32_1 = arith.constant 0 : i32
    return %c0_i32, %c0_i32_0 : i32, i32
  }
  func.func @transform_12(%arg0: i32) -> (i32, i32) {
    %c0_i32 = arith.constant 0 : i32
    %c0_i32_0 = arith.constant 0 : i32
    %c0_i32_1 = arith.constant 0 : i32
    return %c0_i32, %c0_i32_0 : i32, i32
  }
  func.func @transform_13(%arg0: i32) -> (i32, i32) {
    %c0_i32 = arith.constant 0 : i32
    %c0_i32_0 = arith.constant 0 : i32
    %c0_i32_1 = arith.constant 0 : i32
    return %c0_i32, %c0_i32_0 : i32, i32
  }
  func.func @transform_14(%arg0: i32) -> (i32, i32) {
    %c0_i32 = arith.constant 0 : i32
    %c0_i32_0 = arith.constant 0 : i32
    return %arg0, %c0_i32 : i32, i32
  }
}

</mosaic_0001>

<llo_original>
// kernel: tpu_custom_call.1
$region0: #{tpu_custom_call.1}
  #allocation0 [shape = 'u32[]', space=smem, size = 0x4, offset = 0x4, fixed_abs, tag = 'smem constant byte address 0x4 - core index']
  #allocation1 [shape = 'u32[144,128]{1,0:T(1,128)}', space=vmem, size = 0x12000, scoped, tag = 'internal scratch']
  %s0 = inlined_call_operand.hbm [shape: f32[2,8,32], index: 0, kind: input, shape index: {}]
  %s1 = inlined_call_operand.hbm [shape: f32[2,8,32], index: 1, kind: input, shape index: {}]
  %s2 = inlined_call_operand.hbm [shape: f32[2,8,32], index: 2, kind: input, shape index: {}]
  %s3 = inlined_call_operand.vmem [shape: f32[1,32], index: 3, kind: input, shape index: {}]
  %s4 = inlined_call_operand.vmem [shape: f32[1,32], index: 4, kind: input, shape index: {}]
  %s5 = inlined_call_operand.hbm [shape: f32[32,32], index: 5, kind: input, shape index: {}]
  %s6 = inlined_call_operand.hbm [shape: f32[32,32], index: 6, kind: input, shape index: {}]
  %s7 = inlined_call_operand.hbm [shape: f32[32,32], index: 7, kind: input, shape index: {}]
  %s8 = inlined_call_operand.hbm [shape: f32[32,32], index: 8, kind: input, shape index: {}]
  %s9 = inlined_call_operand.vmem [shape: f32[1,32], index: 9, kind: input, shape index: {}]
  %s10 = inlined_call_operand.hbm [shape: f32[32,32], index: 10, kind: input, shape index: {}]
  %s11 = inlined_call_operand.vmem [shape: f32[1,32], index: 11, kind: input, shape index: {}]
  %s12 = inlined_call_operand.hbm [shape: f32[32,32], index: 12, kind: input, shape index: {}]
  %s13 = inlined_call_operand.vmem [shape: f32[1,32], index: 13, kind: input, shape index: {}]
  %s14 = inlined_call_operand.hbm [shape: f32[2,256], index: 14, kind: output, shape index: {}]
  %s15 = sld [smem:[#allocation0]]
  $region102: #{tpu_custom_call.1} parent=0
    _
  %s17 = ssub.s32 1, %s15
  %s18 = scalar_select 0, %s17, %s15
  $region1: #{tpu_custom_call.1} parent=0
    #allocation2 [shape = 'u8[8192]{0}', space=vmem, size = 0x2000, scoped, tag = 'input window, operand 0, single buffered']
    #allocation3 [shape = 's32[1]{0}', space=sflag, size = 0x4, scoped, tag = 'scoped memory for tpu_custom_call.1']
    #allocation4 [shape = 's32[1]{0}', space=sflag, size = 0x4, scoped, tag = 'scoped memory for tpu_custom_call.1']
    #allocation5 [shape = 'u8[8192]{0}', space=vmem, size = 0x2000, scoped, tag = 'input window, operand 1, single buffered']
    #allocation6 [shape = 's32[1]{0}', space=sflag, size = 0x4, scoped, tag = 'scoped memory for tpu_custom_call.1']
    #allocation7 [shape = 'u8[8192]{0}', space=vmem, size = 0x2000, scoped, tag = 'input window, operand 2, single buffered']
    #allocation8 [shape = 'u8[16384]{0}', space=vmem, size = 0x4000, scoped, tag = 'input window, operand 5, single buffered']
    #allocation9 [shape = 's32[1]{0}', space=sflag, size = 0x4, scoped, tag = 'scoped memory for tpu_custom_call.1']
    #allocation10 [shape = 'u8[16384]{0}', space=vmem, size = 0x4000, scoped, tag = 'input window, operand 6, single buffered']
    #allocation11 [shape = 'u8[16384]{0}', space=vmem, size = 0x4000, scoped, tag = 'input window, operand 7, single buffered']
    #allocation12 [shape = 's32[1]{0}', space=sflag, size = 0x4, scoped, tag = 'scoped memory for tpu_custom_call.1']
    #allocation13 [shape = 'u8[16384]{0}', space=vmem, size = 0x4000, scoped, tag = 'input window, operand 8, single buffered']
    #allocation14 [shape = 'u8[16384]{0}', space=vmem, size = 0x4000, scoped, tag = 'input window, operand 10, single buffered']
    #allocation15 [shape = 's32[1]{0}', space=sflag, size = 0x4, scoped, tag = 'scoped memory for tpu_custom_call.1']
    #allocation16 [shape = 'u8[16384]{0}', space=vmem, size = 0x4000, scoped, tag = 'input window, operand 12, single buffered']
    #allocation17 [shape = 'u8[2048]{0}', space=vmem, size = 0x800, scoped, tag = 'output window, operand 0, single buffered']
    %19 = vsyncpa [#allocation3], 0
    %20 = vsyncpa [#allocation6], 0
    %21 = vsyncpa [#allocation9], 0
    %22 = vsyncpa [#allocation12], 0
    %23 = vsyncpa [#allocation15], 0
    %24 = vsyncpa [#allocation4], 0
    // Predicated region
    $region2: #{tpu_custom_call.1} parent=1 // pred_check
      _
    $region3: #{tpu_custom_call.1} parent=1 // pred_check_branch
      %26 = sbr.rel (0) target = $region5
    $region4: #{tpu_custom_call.1} parent=1 // pred_region
      %s28 = ssub.s32 256, 256
      %29 = vsyncadd [#allocation3], %s28
      %s30 = sshll.u32 [#allocation2], 4
      %s31 = int_to_ptr.vmem [resolvable:$true] %s30
      %36 = dma.hbm_to_vmem [thread:$0]  %s0, 256, %s31, [#allocation3], 128, 128, 8
    $region5: #{tpu_custom_call.1} parent=1 // pred_fallthru
      _
    // Predicated region
    $region6: #{tpu_custom_call.1} parent=1 // pred_check
      _
    $region7: #{tpu_custom_call.1} parent=1 // pred_check_branch
      %38 = sbr.rel (0) target = $region9
    $region8: #{tpu_custom_call.1} parent=1 // pred_region
      %s40 = ssub.s32 256, 256
      %41 = vsyncadd [#allocation6], %s40
      %s42 = sshll.u32 [#allocation5], 4
      %s43 = int_to_ptr.vmem [resolvable:$true] %s42
      %48 = dma.hbm_to_vmem [thread:$0]  %s1, 256, %s43, [#allocation6], 128, 128, 8
    $region9: #{tpu_custom_call.1} parent=1 // pred_fallthru
      _
    // Predicated region
    $region10: #{tpu_custom_call.1} parent=1 // pred_check
      _
    $region11: #{tpu_custom_call.1} parent=1 // pred_check_branch
      %50 = sbr.rel (0) target = $region13
    $region12: #{tpu_custom_call.1} parent=1 // pred_region
      %s52 = ssub.s32 256, 256
      %53 = vsyncadd [#allocation6], %s52
      %s54 = sshll.u32 [#allocation7], 4
      %s55 = int_to_ptr.vmem [resolvable:$true] %s54
      %60 = dma.hbm_to_vmem [thread:$0]  %s2, 256, %s55, [#allocation6], 128, 128, 8
    $region13: #{tpu_custom_call.1} parent=1 // pred_fallthru
      _
    // Predicated region
    $region14: #{tpu_custom_call.1} parent=1 // pred_check
      _
    $region15: #{tpu_custom_call.1} parent=1 // pred_check_branch
      %62 = sbr.rel (0) target = $region17
    $region16: #{tpu_custom_call.1} parent=1 // pred_region
      _
    $region17: #{tpu_custom_call.1} parent=1 // pred_fallthru
      _
    // Predicated region
    $region18: #{tpu_custom_call.1} parent=1 // pred_check
      _
    $region19: #{tpu_custom_call.1} parent=1 // pred_check_branch
      %64 = sbr.rel (0) target = $region21
    $region20: #{tpu_custom_call.1} parent=1 // pred_region
      _
    $region21: #{tpu_custom_call.1} parent=1 // pred_fallthru
      _
    // Predicated region
    $region22: #{tpu_custom_call.1} parent=1 // pred_check
      _
    $region23: #{tpu_custom_call.1} parent=1 // pred_check_branch
      %66 = sbr.rel (0) target = $region25
    $region24: #{tpu_custom_call.1} parent=1 // pred_region
      %s68 = ssub.s32 512, 512
      %69 = vsyncadd [#allocation9], %s68
      %s70 = sshll.u32 [#allocation8], 4
      %s71 = int_to_ptr.vmem [resolvable:$true] %s70
      %76 = dma.hbm_to_vmem [thread:$0]  %s5, 512, %s71, [#allocation9], 128, 128, 8
    $region25: #{tpu_custom_call.1} parent=1 // pred_fallthru
      _
    // Predicated region
    $region26: #{tpu_custom_call.1} parent=1 // pred_check
      _
    $region27: #{tpu_custom_call.1} parent=1 // pred_check_branch
      %78 = sbr.rel (0) target = $region29
    $region28: #{tpu_custom_call.1} parent=1 // pred_region
      %s80 = ssub.s32 512, 512
      %81 = vsyncadd [#allocation9], %s80
      %s82 = sshll.u32 [#allocation10], 4
      %s83 = int_to_ptr.vmem [resolvable:$true] %s82
      %88 = dma.hbm_to_vmem [thread:$0]  %s6, 512, %s83, [#allocation9], 128, 128, 8
    $region29: #{tpu_custom_call.1} parent=1 // pred_fallthru
      _
    // Predicated region
    $region30: #{tpu_custom_call.1} parent=1 // pred_check
      _
    $region31: #{tpu_custom_call.1} parent=1 // pred_check_branch
      %90 = sbr.rel (0) target = $region33
    $region32: #{tpu_custom_call.1} parent=1 // pred_region
      %s92 = ssub.s32 512, 512
      %93 = vsyncadd [#allocation12], %s92
      %s94 = sshll.u32 [#allocation11], 4
      %s95 = int_to_ptr.vmem [resolvable:$true] %s94
      %100 = dma.hbm_to_vmem [thread:$0]  %s7, 512, %s95, [#allocation12], 128, 128, 8
    $region33: #{tpu_custom_call.1} parent=1 // pred_fallthru
      _
    // Predicated region
    $region34: #{tpu_custom_call.1} parent=1 // pred_check
      _
    $region35: #{tpu_custom_call.1} parent=1 // pred_check_branch
      %102 = sbr.rel (0) target = $region37
    $region36: #{tpu_custom_call.1} parent=1 // pred_region
      %s104 = ssub.s32 512, 512
      %105 = vsyncadd [#allocation12], %s104
      %s106 = sshll.u32 [#allocation13], 4
      %s107 = int_to_ptr.vmem [resolvable:$true] %s106
      %112 = dma.hbm_to_vmem [thread:$0]  %s8, 512, %s107, [#allocation12], 128, 128, 8
    $region37: #{tpu_custom_call.1} parent=1 // pred_fallthru
      _
    // Predicated region
    $region38: #{tpu_custom_call.1} parent=1 // pred_check
      _
    $region39: #{tpu_custom_call.1} parent=1 // pred_check_branch
      %114 = sbr.rel (0) target = $region41
    $region40: #{tpu_custom_call.1} parent=1 // pred_region
      _
    $region41: #{tpu_custom_call.1} parent=1 // pred_fallthru
      _
    // Predicated region
    $region42: #{tpu_custom_call.1} parent=1 // pred_check
      _
    $region43: #{tpu_custom_call.1} parent=1 // pred_check_branch
      %116 = sbr.rel (0) target = $region45
    $region44: #{tpu_custom_call.1} parent=1 // pred_region
      %s118 = ssub.s32 512, 512
      %119 = vsyncadd [#allocation15], %s118
      %s120 = sshll.u32 [#allocation14], 4
      %s121 = int_to_ptr.vmem [resolvable:$true] %s120
      %126 = dma.hbm_to_vmem [thread:$0]  %s10, 512, %s121, [#allocation15], 128, 128, 8
    $region45: #{tpu_custom_call.1} parent=1 // pred_fallthru
      _
    // Predicated region
    $region46: #{tpu_custom_call.1} parent=1 // pred_check
      _
    $region47: #{tpu_custom_call.1} parent=1 // pred_check_branch
      %128 = sbr.rel (0) target = $region49
    $region48: #{tpu_custom_call.1} parent=1 // pred_region
      _
    $region49: #{tpu_custom_call.1} parent=1 // pred_fallthru
      _
    // Predicated region
    $region50: #{tpu_custom_call.1} parent=1 // pred_check
      _
    $region51: #{tpu_custom_call.1} parent=1 // pred_check_branch
      %130 = sbr.rel (0) target = $region53
    $region52: #{tpu_custom_call.1} parent=1 // pred_region
      %s132 = ssub.s32 512, 512
      %133 = vsyncadd [#allocation15], %s132
      %s134 = sshll.u32 [#allocation16], 4
      %s135 = int_to_ptr.vmem [resolvable:$true] %s134
      %140 = dma.hbm_to_vmem [thread:$0]  %s12, 512, %s135, [#allocation15], 128, 128, 8
    $region53: #{tpu_custom_call.1} parent=1 // pred_fallthru
      _
    // Predicated region
    $region54: #{tpu_custom_call.1} parent=1 // pred_check
      _
    $region55: #{tpu_custom_call.1} parent=1 // pred_check_branch
      %142 = sbr.rel (0) target = $region57
    $region56: #{tpu_custom_call.1} parent=1 // pred_region
      _
    $region57: #{tpu_custom_call.1} parent=1 // pred_fallthru
      _
    // Predicated region
    $region58: #{tpu_custom_call.1} parent=1 // pred_check
      _
    $region59: #{tpu_custom_call.1} parent=1 // pred_check_branch
      %144 = sbr.rel (0) target = $region61
    $region60: #{tpu_custom_call.1} parent=1 // pred_region
      %145 = dma.done [#allocation3], 256
    $region61: #{tpu_custom_call.1} parent=1 // pred_fallthru
      _
    // Predicated region
    $region62: #{tpu_custom_call.1} parent=1 // pred_check
      _
    $region63: #{tpu_custom_call.1} parent=1 // pred_check_branch
      %147 = sbr.rel (0) target = $region65
    $region64: #{tpu_custom_call.1} parent=1 // pred_region
      %148 = dma.done [#allocation6], 256
    $region65: #{tpu_custom_call.1} parent=1 // pred_fallthru
      _
    // Predicated region
    $region66: #{tpu_custom_call.1} parent=1 // pred_check
      _
    $region67: #{tpu_custom_call.1} parent=1 // pred_check_branch
      %150 = sbr.rel (0) target = $region69
    $region68: #{tpu_custom_call.1} parent=1 // pred_region
      %151 = dma.done [#allocation6], 256
    $region69: #{tpu_custom_call.1} parent=1 // pred_fallthru
      _
    // Predicated region
    $region70: #{tpu_custom_call.1} parent=1 // pred_check
      _
    $region71: #{tpu_custom_call.1} parent=1 // pred_check_branch
      %153 = sbr.rel (0) target = $region73
    $region72: #{tpu_custom_call.1} parent=1 // pred_region
      %154 = dma.done [#allocation9], 512
    $region73: #{tpu_custom_call.1} parent=1 // pred_fallthru
      _
    // Predicated region
    $region74: #{tpu_custom_call.1} parent=1 // pred_check
      _
    $region75: #{tpu_custom_call.1} parent=1 // pred_check_branch
      %156 = sbr.rel (0) target = $region77
    $region76: #{tpu_custom_call.1} parent=1 // pred_region
      %157 = dma.done [#allocation9], 512
    $region77: #{tpu_custom_call.1} parent=1 // pred_fallthru
      _
    // Predicated region
    $region78: #{tpu_custom_call.1} parent=1 // pred_check
      _
    $region79: #{tpu_custom_call.1} parent=1 // pred_check_branch
      %159 = sbr.rel (0) target = $region81
    $region80: #{tpu_custom_call.1} parent=1 // pred_region
      %160 = dma.done [#allocation12], 512
    $region81: #{tpu_custom_call.1} parent=1 // pred_fallthru
      _
    // Predicated region
    $region82: #{tpu_custom_call.1} parent=1 // pred_check
      _
    $region83: #{tpu_custom_call.1} parent=1 // pred_check_branch
      %162 = sbr.rel (0) target = $region85
    $region84: #{tpu_custom_call.1} parent=1 // pred_region
      %163 = dma.done [#allocation12], 512
    $region85: #{tpu_custom_call.1} parent=1 // pred_fallthru
      _
    // Predicated region
    $region86: #{tpu_custom_call.1} parent=1 // pred_check
      _
    $region87: #{tpu_custom_call.1} parent=1 // pred_check_branch
      %165 = sbr.rel (0) target = $region89
    $region88: #{tpu_custom_call.1} parent=1 // pred_region
      %166 = dma.done [#allocation15], 512
    $region89: #{tpu_custom_call.1} parent=1 // pred_fallthru
      _
    // Predicated region
    $region90: #{tpu_custom_call.1} parent=1 // pred_check
      _
    $region91: #{tpu_custom_call.1} parent=1 // pred_check_branch
      %168 = sbr.rel (0) target = $region93
    $region92: #{tpu_custom_call.1} parent=1 // pred_region
      %169 = dma.done [#allocation15], 512
    $region93: #{tpu_custom_call.1} parent=1 // pred_fallthru
      _
    %v170 = vld [vmem:[#allocation2] sm:$0xff]
    %v171 = vld [vmem:[#allocation2 + $0x8] sm:$0xff]
    %v172 = vld [vmem:[#allocation5] sm:$0xff]
    %v173 = vld [vmem:[#allocation5 + $0x8] sm:$0xff]
    %v174 = vld [vmem:[#allocation7] sm:$0xff]
    %v175 = vld [vmem:[#allocation7 + $0x8] sm:$0xff]
    %v176 = vld [vmem:[%s3] sm:$0x1]
    %v177 = vld [vmem:[%s4] sm:$0x1]
    %vm178 = vcmask 261120
    %v179 = vsel %vm178, %v170, 0.0
    %180 = vadd.xlane.f32.xlu0 %v179
    %v181 = vpop.xlane.xlu0 %180
    %v182 = vsel %vm178, %v171, 0.0
    %183 = vadd.xlane.f32.xlu0 %v182
    %v184 = vpop.xlane.xlu0 %183
    %v185 = vrcp.pop 32.0
    %v186 = vmul.f32 %v181, %v185
    %v187 = vmul.f32 %v184, %v185
    %v188 = vsub.f32 %v170, %v186
    %v189 = vsub.f32 %v171, %v187
    %v190 = vmul.f32 %v188, %v188
    %v191 = vmul.f32 %v189, %v189
    %v192 = vsel %vm178, %v190, 0.0
    %193 = vadd.xlane.f32.xlu0 %v192
    %v194 = vpop.xlane.xlu0 %193
    %v195 = vsel %vm178, %v191, 0.0
    %196 = vadd.xlane.f32.xlu0 %v195
    %v197 = vpop.xlane.xlu0 %196
    %v198 = vmul.f32 %v194, %v185
    %v199 = vmul.f32 %v197, %v185
    %v200 = vadd.f32 %v198, 1e-05
    %v201 = vadd.f32 %v199, 1e-05
    %v202 = vrsqrt.pop %v200
    %v203 = vrsqrt.pop %v201
    %v204 = vmul.f32 %v188, %v202
    %v205 = vmul.f32 %v189, %v203
    %v207 = vlaneseq
    %v208 = vshrl.u32 %v207, 7
    %v209 = vsub.s32 0, %v208
    %v210 = vrot.slane %v176, %v209
    %v212 = vmul.f32 %v204, %v210
    %v213 = vmul.f32 %v205, %v210
    %v215 = vlaneseq
    %v216 = vshrl.u32 %v215, 7
    %v217 = vsub.s32 0, %v216
    %v218 = vrot.slane %v177, %v217
    %v220 = vadd.f32 %v212, %v218
    %v221 = vadd.f32 %v213, %v218
    %v222 = vsel %vm178, %v172, 0.0
    %223 = vadd.xlane.f32.xlu0 %v222
    %v224 = vpop.xlane.xlu0 %223
    %v225 = vsel %vm178, %v173, 0.0
    %226 = vadd.xlane.f32.xlu0 %v225
    %v227 = vpop.xlane.xlu0 %226
    %v228 = vmul.f32 %v224, %v185
    %v229 = vmul.f32 %v227, %v185
    %v230 = vsub.f32 %v172, %v228
    %v231 = vsub.f32 %v173, %v229
    %v232 = vmul.f32 %v230, %v230
    %v233 = vmul.f32 %v231, %v231
    %v234 = vsel %vm178, %v232, 0.0
    %235 = vadd.xlane.f32.xlu0 %v234
    %v236 = vpop.xlane.xlu0 %235
    %v237 = vsel %vm178, %v233, 0.0
    %238 = vadd.xlane.f32.xlu0 %v237
    %v239 = vpop.xlane.xlu0 %238
    %v240 = vmul.f32 %v236, %v185
    %v241 = vmul.f32 %v239, %v185
    %v242 = vadd.f32 %v240, 1e-05
    %v243 = vadd.f32 %v241, 1e-05
    %v244 = vrsqrt.pop %v242
    %v245 = vrsqrt.pop %v243
    %v246 = vmul.f32 %v230, %v244
    %v247 = vmul.f32 %v231, %v245
    %v248 = vmul.f32 %v246, %v210
    %v249 = vmul.f32 %v247, %v210
    %v250 = vadd.f32 %v248, %v218
    %v251 = vadd.f32 %v249, %v218
    %v252 = vsel %vm178, %v174, 0.0
    %253 = vadd.xlane.f32.xlu0 %v252
    %v254 = vpop.xlane.xlu0 %253
    %v255 = vsel %vm178, %v175, 0.0
    %256 = vadd.xlane.f32.xlu0 %v255
    %v257 = vpop.xlane.xlu0 %256
    %v258 = vmul.f32 %v254, %v185
    %v259 = vmul.f32 %v257, %v185
    %v260 = vsub.f32 %v174, %v258
    %v261 = vsub.f32 %v175, %v259
    %v262 = vmul.f32 %v260, %v260
    %v263 = vmul.f32 %v261, %v261
    %v264 = vsel %vm178, %v262, 0.0
    %265 = vadd.xlane.f32.xlu0 %v264
    %v266 = vpop.xlane.xlu0 %265
    %v267 = vsel %vm178, %v263, 0.0
    %268 = vadd.xlane.f32.xlu0 %v267
    %v269 = vpop.xlane.xlu0 %268
    %v270 = vmul.f32 %v266, %v185
    %v271 = vmul.f32 %v269, %v185
    %v272 = vadd.f32 %v270, 1e-05
    %v273 = vadd.f32 %v271, 1e-05
    %v274 = vrsqrt.pop %v272
    %v275 = vrsqrt.pop %v273
    %v276 = vmul.f32 %v260, %v274
    %v277 = vmul.f32 %v261, %v275
    %v278 = vmul.f32 %v276, %v210
    %v279 = vmul.f32 %v277, %v210
    %v280 = vadd.f32 %v278, %v218
    %v281 = vadd.f32 %v279, %v218
    %v282 = vld [vmem:[#allocation8] sm:$0xff]
    %v283 = vld [vmem:[#allocation8 + $0x8] sm:$0xff]
    %v284 = vld [vmem:[#allocation8 + $0x10] sm:$0xff]
    %v285 = vld [vmem:[#allocation8 + $0x18] sm:$0xff]
    %v287 = vsel %vm178, %v220, 0
    %v290 = vsel %vm178, %v221, 0
    %292 = vmatprep.subr.mxu0 0.0
    %293 = vmatpush1.msra.mxu0 0.0
    %294 = vmatprep.subr.mxu0 0.0
    %295 = vmatpush1.msra.mxu0 0.0
    %296 = vmatprep.subr.mxu0 0.0
    %297 = vmatpush1.msra.mxu0 0.0
    %298 = vmatprep.subr.mxu0 0.0
    %299 = vmatpush1.msra.mxu0 0.0
    %300 = vmatprep.subr.mxu0 0.0
    %301 = vmatpush1.msra.mxu0 0.0
    %302 = vmatprep.subr.mxu0 0.0
    %303 = vmatpush1.msra.mxu0 0.0
    %304 = vmatprep.subr.mxu0 0.0
    %305 = vmatpush1.msra.mxu0 0.0
    %306 = vmatprep.subr.mxu0 0.0
    %307 = vmatpush1.msra.mxu0 0.0
    %308 = vmatprep.subr.mxu0 0.0
    %309 = vmatpush1.msra.mxu0 0.0
    %310 = vmatprep.subr.mxu0 0.0
    %311 = vmatpush1.msra.mxu0 0.0
    %312 = vmatprep.subr.mxu0 0.0
    %313 = vmatpush1.msra.mxu0 0.0
    %314 = vmatprep.subr.mxu0 0.0
    %315 = vmatpush1.msra.mxu0 0.0
    %316 = vmatprep.subr.mxu0 0.0
    %317 = vmatpush1.msra.mxu0 %v285
    %318 = vmatprep.subr.mxu0 0.0
    %319 = vmatpush1.msra.mxu0 %v284
    %320 = vmatprep.subr.mxu0 0.0
    %321 = vmatpush1.msra.mxu0 %v283
    %322 = vmatprep.subr.mxu0 0.0
    %323 = vmatpush1.msra.mxu0 %v282
    %324 = vmatprep.subr.mxu0 0.0
    %325 = vmatpush2.msra.mxu0 0.0
    %326 = vmatprep.subr.mxu0 0.0
    %327 = vmatpush2.msra.mxu0 0.0
    %328 = vmatprep.subr.mxu0 0.0
    %329 = vmatpush2.msra.mxu0 0.0
    %330 = vmatprep.subr.mxu0 0.0
    %331 = vmatpush2.msra.mxu0 0.0
    %332 = vmatprep.subr.mxu0 0.0
    %333 = vmatpush2.msra.mxu0 0.0
    %334 = vmatprep.subr.mxu0 0.0
    %335 = vmatpush2.msra.mxu0 0.0
    %336 = vmatprep.subr.mxu0 0.0
    %337 = vmatpush2.msra.mxu0 0.0
    %338 = vmatprep.subr.mxu0 0.0
    %339 = vmatpush2.msra.mxu0 0.0
    %340 = vmatprep.subr.mxu0 0.0
    %341 = vmatpush2.msra.mxu0 0.0
    %342 = vmatprep.subr.mxu0 0.0
    %343 = vmatpush2.msra.mxu0 0.0
    %344 = vmatprep.subr.mxu0 0.0
    %345 = vmatpush2.msra.mxu0 0.0
    %346 = vmatprep.subr.mxu0 0.0
    %347 = vmatpush2.msra.mxu0 0.0
    %348 = vmatprep.subr.mxu0 0.0
    %349 = vmatpush2.msra.mxu0 0.0
    %350 = vmatprep.subr.mxu0 0.0
    %351 = vmatpush2.msra.mxu0 0.0
    %352 = vmatprep.subr.mxu0 0.0
    %353 = vmatpush2.msra.mxu0 0.0
    %354 = vmatprep.subr.mxu0 0.0
    %355 = vmatpush2.msra.mxu0 0.0
    %356 = vmatprep.mubr.f32.mxu0 0.0
    %357 = vmatmul.mubr.f32.gmra.mxu0 %v287
    %v358 = vpop.f32.mrf.mxu0
    %v359 = vadd.f32 0.0, %v358
    %v360 = vpop.f32.mrf.mxu0
    %361 = vmatprep.mubr.f32.mxu0 0.0
    %362 = vmatmul.mubr.f32.gmra.mxu0 %v290
    %v363 = vpop.f32.mrf.mxu0
    %v364 = vadd.f32 0.0, %v363
    %v365 = vpop.f32.mrf.mxu0
    %366 = vdwg.mxu0
    %v367 = vld [vmem:[#allocation10] sm:$0xff]
    %v368 = vld [vmem:[#allocation10 + $0x8] sm:$0xff]
    %v369 = vld [vmem:[#allocation10 + $0x10] sm:$0xff]
    %v370 = vld [vmem:[#allocation10 + $0x18] sm:$0xff]
    %v372 = vsel %vm178, %v250, 0
    %v375 = vsel %vm178, %v251, 0
    %377 = vmatprep.subr.mxu0 0.0
    %378 = vmatpush1.msra.mxu0 0.0
    %379 = vmatprep.subr.mxu0 0.0
    %380 = vmatpush1.msra.mxu0 0.0
    %381 = vmatprep.subr.mxu0 0.0
    %382 = vmatpush1.msra.mxu0 0.0
    %383 = vmatprep.subr.mxu0 0.0
    %384 = vmatpush1.msra.mxu0 0.0
    %385 = vmatprep.subr.mxu0 0.0
    %386 = vmatpush1.msra.mxu0 0.0
    %387 = vmatprep.subr.mxu0 0.0
    %388 = vmatpush1.msra.mxu0 0.0
    %389 = vmatprep.subr.mxu0 0.0
    %390 = vmatpush1.msra.mxu0 0.0
    %391 = vmatprep.subr.mxu0 0.0
    %392 = vmatpush1.msra.mxu0 0.0
    %393 = vmatprep.subr.mxu0 0.0
    %394 = vmatpush1.msra.mxu0 0.0
    %395 = vmatprep.subr.mxu0 0.0
    %396 = vmatpush1.msra.mxu0 0.0
    %397 = vmatprep.subr.mxu0 0.0
    %398 = vmatpush1.msra.mxu0 0.0
    %399 = vmatprep.subr.mxu0 0.0
    %400 = vmatpush1.msra.mxu0 0.0
    %401 = vmatprep.subr.mxu0 0.0
    %402 = vmatpush1.msra.mxu0 %v370
    %403 = vmatprep.subr.mxu0 0.0
    %404 = vmatpush1.msra.mxu0 %v369
    %405 = vmatprep.subr.mxu0 0.0
    %406 = vmatpush1.msra.mxu0 %v368
    %407 = vmatprep.subr.mxu0 0.0
    %408 = vmatpush1.msra.mxu0 %v367
    %409 = vmatprep.subr.mxu0 0.0
    %410 = vmatpush2.msra.mxu0 0.0
    %411 = vmatprep.subr.mxu0 0.0
    %412 = vmatpush2.msra.mxu0 0.0
    %413 = vmatprep.subr.mxu0 0.0
    %414 = vmatpush2.msra.mxu0 0.0
    %415 = vmatprep.subr.mxu0 0.0
    %416 = vmatpush2.msra.mxu0 0.0
    %417 = vmatprep.subr.mxu0 0.0
    %418 = vmatpush2.msra.mxu0 0.0
    %419 = vmatprep.subr.mxu0 0.0
    %420 = vmatpush2.msra.mxu0 0.0
    %421 = vmatprep.subr.mxu0 0.0
    %422 = vmatpush2.msra.mxu0 0.0
    %423 = vmatprep.subr.mxu0 0.0
    %424 = vmatpush2.msra.mxu0 0.0
    %425 = vmatprep.subr.mxu0 0.0
    %426 = vmatpush2.msra.mxu0 0.0
    %427 = vmatprep.subr.mxu0 0.0
    %428 = vmatpush2.msra.mxu0 0.0
    %429 = vmatprep.subr.mxu0 0.0
    %430 = vmatpush2.msra.mxu0 0.0
    %431 = vmatprep.subr.mxu0 0.0
    %432 = vmatpush2.msra.mxu0 0.0
    %433 = vmatprep.subr.mxu0 0.0
    %434 = vmatpush2.msra.mxu0 0.0
    %435 = vmatprep.subr.mxu0 0.0
    %436 = vmatpush2.msra.mxu0 0.0
    %437 = vmatprep.subr.mxu0 0.0
    %438 = vmatpush2.msra.mxu0 0.0
    %439 = vmatprep.subr.mxu0 0.0
    %440 = vmatpush2.msra.mxu0 0.0
    %441 = vmatprep.mubr.f32.mxu0 0.0
    %442 = vmatmul.mubr.f32.gmra.mxu0 %v372
    %v443 = vpop.f32.mrf.mxu0
    %v444 = vadd.f32 0.0, %v443
    %v445 = vpop.f32.mrf.mxu0
    %446 = vmatprep.mubr.f32.mxu0 0.0
    %447 = vmatmul.mubr.f32.gmra.mxu0 %v375
    %v448 = vpop.f32.mrf.mxu0
    %v449 = vadd.f32 0.0, %v448
    %v450 = vpop.f32.mrf.mxu0
    %451 = vdwg.mxu0
    %v452 = vld [vmem:[#allocation11] sm:$0xff]
    %v453 = vld [vmem:[#allocation11 + $0x8] sm:$0xff]
    %v454 = vld [vmem:[#allocation11 + $0x10] sm:$0xff]
    %v455 = vld [vmem:[#allocation11 + $0x18] sm:$0xff]
    %v457 = vsel %vm178, %v280, 0
    %v460 = vsel %vm178, %v281, 0
    %462 = vmatprep.subr.mxu0 0.0
    %463 = vmatpush1.msra.mxu0 0.0
    %464 = vmatprep.subr.mxu0 0.0
    %465 = vmatpush1.msra.mxu0 0.0
    %466 = vmatprep.subr.mxu0 0.0
    %467 = vmatpush1.msra.mxu0 0.0
    %468 = vmatprep.subr.mxu0 0.0
    %469 = vmatpush1.msra.mxu0 0.0
    %470 = vmatprep.subr.mxu0 0.0
    %471 = vmatpush1.msra.mxu0 0.0
    %472 = vmatprep.subr.mxu0 0.0
    %473 = vmatpush1.msra.mxu0 0.0
    %474 = vmatprep.subr.mxu0 0.0
    %475 = vmatpush1.msra.mxu0 0.0
    %476 = vmatprep.subr.mxu0 0.0
    %477 = vmatpush1.msra.mxu0 0.0
    %478 = vmatprep.subr.mxu0 0.0
    %479 = vmatpush1.msra.mxu0 0.0
    %480 = vmatprep.subr.mxu0 0.0
    %481 = vmatpush1.msra.mxu0 0.0
    %482 = vmatprep.subr.mxu0 0.0
    %483 = vmatpush1.msra.mxu0 0.0
    %484 = vmatprep.subr.mxu0 0.0
    %485 = vmatpush1.msra.mxu0 0.0
    %486 = vmatprep.subr.mxu0 0.0
    %487 = vmatpush1.msra.mxu0 %v455
    %488 = vmatprep.subr.mxu0 0.0
    %489 = vmatpush1.msra.mxu0 %v454
    %490 = vmatprep.subr.mxu0 0.0
    %491 = vmatpush1.msra.mxu0 %v453
    %492 = vmatprep.subr.mxu0 0.0
    %493 = vmatpush1.msra.mxu0 %v452
    %494 = vmatprep.subr.mxu0 0.0
    %495 = vmatpush2.msra.mxu0 0.0
    %496 = vmatprep.subr.mxu0 0.0
    %497 = vmatpush2.msra.mxu0 0.0
    %498 = vmatprep.subr.mxu0 0.0
    %499 = vmatpush2.msra.mxu0 0.0
    %500 = vmatprep.subr.mxu0 0.0
    %501 = vmatpush2.msra.mxu0 0.0
    %502 = vmatprep.subr.mxu0 0.0
    %503 = vmatpush2.msra.mxu0 0.0
    %504 = vmatprep.subr.mxu0 0.0
    %505 = vmatpush2.msra.mxu0 0.0
    %506 = vmatprep.subr.mxu0 0.0
    %507 = vmatpush2.msra.mxu0 0.0
    %508 = vmatprep.subr.mxu0 0.0
    %509 = vmatpush2.msra.mxu0 0.0
    %510 = vmatprep.subr.mxu0 0.0
    %511 = vmatpush2.msra.mxu0 0.0
    %512 = vmatprep.subr.mxu0 0.0
    %513 = vmatpush2.msra.mxu0 0.0
    %514 = vmatprep.subr.mxu0 0.0
    %515 = vmatpush2.msra.mxu0 0.0
    %516 = vmatprep.subr.mxu0 0.0
    %517 = vmatpush2.msra.mxu0 0.0
    %518 = vmatprep.subr.mxu0 0.0
    %519 = vmatpush2.msra.mxu0 0.0
    %520 = vmatprep.subr.mxu0 0.0
    %521 = vmatpush2.msra.mxu0 0.0
    %522 = vmatprep.subr.mxu0 0.0
    %523 = vmatpush2.msra.mxu0 0.0
    %524 = vmatprep.subr.mxu0 0.0
    %525 = vmatpush2.msra.mxu0 0.0
    %526 = vmatprep.mubr.f32.mxu0 0.0
    %527 = vmatmul.mubr.f32.gmra.mxu0 %v457
    %v528 = vpop.f32.mrf.mxu0
    %v529 = vadd.f32 0.0, %v528
    %v530 = vpop.f32.mrf.mxu0
    %531 = vmatprep.mubr.f32.mxu0 0.0
    %532 = vmatmul.mubr.f32.gmra.mxu0 %v460
    %v533 = vpop.f32.mrf.mxu0
    %v534 = vadd.f32 0.0, %v533
    %v535 = vpop.f32.mrf.mxu0
    %536 = vdwg.mxu0
    %vm537 = vcmask 64512
    %v539 = vsel %vm537, %v359, 0
    %v542 = vsel %vm537, %v444, 0
    %544 = vmatprep.subr.mxu0 0.0
    %545 = vmatpush1.xpose.msra.mxu0 0.0
    %546 = vmatprep.subr.mxu0 0.0
    %547 = vmatpush1.xpose.msra.mxu0 0.0
    %548 = vmatprep.subr.mxu0 0.0
    %549 = vmatpush1.xpose.msra.mxu0 0.0
    %550 = vmatprep.subr.mxu0 0.0
    %551 = vmatpush1.xpose.msra.mxu0 0.0
    %552 = vmatprep.subr.mxu0 0.0
    %553 = vmatpush1.xpose.msra.mxu0 0.0
    %554 = vmatprep.subr.mxu0 0.0
    %555 = vmatpush1.xpose.msra.mxu0 0.0
    %556 = vmatprep.subr.mxu0 0.0
    %557 = vmatpush1.xpose.msra.mxu0 0.0
    %558 = vmatprep.subr.mxu0 0.0
    %559 = vmatpush1.xpose.msra.mxu0 0.0
    %560 = vmatprep.subr.mxu0 0.0
    %561 = vmatpush1.xpose.msra.mxu0 0.0
    %562 = vmatprep.subr.mxu0 0.0
    %563 = vmatpush1.xpose.msra.mxu0 0.0
    %564 = vmatprep.subr.mxu0 0.0
    %565 = vmatpush1.xpose.msra.mxu0 0.0
    %566 = vmatprep.subr.mxu0 0.0
    %567 = vmatpush1.xpose.msra.mxu0 0.0
    %568 = vmatprep.subr.mxu0 0.0
    %569 = vmatpush1.xpose.msra.mxu0 0.0
    %570 = vmatprep.subr.mxu0 0.0
    %571 = vmatpush1.xpose.msra.mxu0 0.0
    %572 = vmatprep.subr.mxu0 0.0
    %573 = vmatpush1.xpose.msra.mxu0 0.0
    %574 = vmatprep.subr.mxu0 0.0
    %575 = vmatpush1.xpose.msra.mxu0 %v542
    %576 = vmatprep.subr.mxu0 0.0
    %577 = vmatpush2.xpose.msra.mxu0 0.0
    %578 = vmatprep.subr.mxu0 0.0
    %579 = vmatpush2.xpose.msra.mxu0 0.0
    %580 = vmatprep.subr.mxu0 0.0
    %581 = vmatpush2.xpose.msra.mxu0 0.0
    %582 = vmatprep.subr.mxu0 0.0
    %583 = vmatpush2.xpose.msra.mxu0 0.0
    %584 = vmatprep.subr.mxu0 0.0
    %585 = vmatpush2.xpose.msra.mxu0 0.0
    %586 = vmatprep.subr.mxu0 0.0
    %587 = vmatpush2.xpose.msra.mxu0 0.0
    %588 = vmatprep.subr.mxu0 0.0
    %589 = vmatpush2.xpose.msra.mxu0 0.0
    %590 = vmatprep.subr.mxu0 0.0
    %591 = vmatpush2.xpose.msra.mxu0 0.0
    %592 = vmatprep.subr.mxu0 0.0
    %593 = vmatpush2.xpose.msra.mxu0 0.0
    %594 = vmatprep.subr.mxu0 0.0
    %595 = vmatpush2.xpose.msra.mxu0 0.0
    %596 = vmatprep.subr.mxu0 0.0
    %597 = vmatpush2.xpose.msra.mxu0 0.0
    %598 = vmatprep.subr.mxu0 0.0
    %599 = vmatpush2.xpose.msra.mxu0 0.0
    %600 = vmatprep.subr.mxu0 0.0
    %601 = vmatpush2.xpose.msra.mxu0 0.0
    %602 = vmatprep.subr.mxu0 0.0
    %603 = vmatpush2.xpose.msra.mxu0 0.0
    %604 = vmatprep.subr.mxu0 0.0
    %605 = vmatpush2.xpose.msra.mxu0 0.0
    %606 = vmatprep.subr.mxu0 0.0
    %607 = vmatpush2.xpose.msra.mxu0 0.0
    %608 = vmatprep.mubr.f32.mxu0 0.0
    %609 = vmatmul.mubr.f32.gmra.mxu0 %v539
    %v610 = vpop.f32.mrf.mxu0
    %v611 = vadd.f32 0.0, %v610
    %v612 = vpop.f32.mrf.mxu0
    %613 = vdwg.mxu0
    %v615 = vsel %vm537, %v364, 0
    %v618 = vsel %vm537, %v449, 0
    %620 = vmatprep.subr.mxu0 0.0
    %621 = vmatpush1.xpose.msra.mxu0 0.0
    %622 = vmatprep.subr.mxu0 0.0
    %623 = vmatpush1.xpose.msra.mxu0 0.0
    %624 = vmatprep.subr.mxu0 0.0
    %625 = vmatpush1.xpose.msra.mxu0 0.0
    %626 = vmatprep.subr.mxu0 0.0
    %627 = vmatpush1.xpose.msra.mxu0 0.0
    %628 = vmatprep.subr.mxu0 0.0
    %629 = vmatpush1.xpose.msra.mxu0 0.0
    %630 = vmatprep.subr.mxu0 0.0
    %631 = vmatpush1.xpose.msra.mxu0 0.0
    %632 = vmatprep.subr.mxu0 0.0
    %633 = vmatpush1.xpose.msra.mxu0 0.0
    %634 = vmatprep.subr.mxu0 0.0
    %635 = vmatpush1.xpose.msra.mxu0 0.0
    %636 = vmatprep.subr.mxu0 0.0
    %637 = vmatpush1.xpose.msra.mxu0 0.0
    %638 = vmatprep.subr.mxu0 0.0
    %639 = vmatpush1.xpose.msra.mxu0 0.0
    %640 = vmatprep.subr.mxu0 0.0
    %641 = vmatpush1.xpose.msra.mxu0 0.0
    %642 = vmatprep.subr.mxu0 0.0
    %643 = vmatpush1.xpose.msra.mxu0 0.0
    %644 = vmatprep.subr.mxu0 0.0
    %645 = vmatpush1.xpose.msra.mxu0 0.0
    %646 = vmatprep.subr.mxu0 0.0
    %647 = vmatpush1.xpose.msra.mxu0 0.0
    %648 = vmatprep.subr.mxu0 0.0
    %649 = vmatpush1.xpose.msra.mxu0 0.0
    %650 = vmatprep.subr.mxu0 0.0
    %651 = vmatpush1.xpose.msra.mxu0 %v618
    %652 = vmatprep.subr.mxu0 0.0
    %653 = vmatpush2.xpose.msra.mxu0 0.0
    %654 = vmatprep.subr.mxu0 0.0
    %655 = vmatpush2.xpose.msra.mxu0 0.0
    %656 = vmatprep.subr.mxu0 0.0
    %657 = vmatpush2.xpose.msra.mxu0 0.0
    %658 = vmatprep.subr.mxu0 0.0
    %659 = vmatpush2.xpose.msra.mxu0 0.0
    %660 = vmatprep.subr.mxu0 0.0
    %661 = vmatpush2.xpose.msra.mxu0 0.0
    %662 = vmatprep.subr.mxu0 0.0
    %663 = vmatpush2.xpose.msra.mxu0 0.0
    %664 = vmatprep.subr.mxu0 0.0
    %665 = vmatpush2.xpose.msra.mxu0 0.0
    %666 = vmatprep.subr.mxu0 0.0
    %667 = vmatpush2.xpose.msra.mxu0 0.0
    %668 = vmatprep.subr.mxu0 0.0
    %669 = vmatpush2.xpose.msra.mxu0 0.0
    %670 = vmatprep.subr.mxu0 0.0
    %671 = vmatpush2.xpose.msra.mxu0 0.0
    %672 = vmatprep.subr.mxu0 0.0
    %673 = vmatpush2.xpose.msra.mxu0 0.0
    %674 = vmatprep.subr.mxu0 0.0
    %675 = vmatpush2.xpose.msra.mxu0 0.0
    %676 = vmatprep.subr.mxu0 0.0
    %677 = vmatpush2.xpose.msra.mxu0 0.0
    %678 = vmatprep.subr.mxu0 0.0
    %679 = vmatpush2.xpose.msra.mxu0 0.0
    %680 = vmatprep.subr.mxu0 0.0
    %681 = vmatpush2.xpose.msra.mxu0 0.0
    %682 = vmatprep.subr.mxu0 0.0
    %683 = vmatpush2.xpose.msra.mxu0 0.0
    %684 = vmatprep.mubr.f32.mxu0 0.0
    %685 = vmatmul.mubr.f32.gmra.mxu0 %v615
    %v686 = vpop.f32.mrf.mxu0
    %v687 = vadd.f32 0.0, %v686
    %v688 = vpop.f32.mrf.mxu0
    %689 = vdwg.mxu0
    %v690 = vsel %vm537, %v611, -inf
    %691 = vmax.xlane.f32.xlu0 %v690
    %v692 = vpop.xlane.xlu0 %691
    %v693 = vsel %vm537, %v687, -inf
    %694 = vmax.xlane.f32.xlu0 %v693
    %v695 = vpop.xlane.xlu0 %694
    %v696 = vsub.f32 %v611, %v692
    %v697 = vsub.f32 %v687, %v695
    %v698 = vmul.f32 %v696, 1.442695
    %v699 = vpow.pop %v698
    %v700 = vmul.f32 %v697, 1.442695
    %v701 = vpow.pop %v700
    %v702 = vsel %vm537, %v699, 0.0
    %703 = vadd.xlane.f32.xlu0 %v702
    %v704 = vpop.xlane.xlu0 %703
    %v705 = vsel %vm537, %v701, 0.0
    %706 = vadd.xlane.f32.xlu0 %v705
    %v707 = vpop.xlane.xlu0 %706
    %v708 = vrcp.pop %v704
    %v709 = vrcp.pop %v707
    %v710 = vmul.f32 %v699, %v708
    %v711 = vmul.f32 %v701, %v709
    %v713 = vsel %vm537, %v710, 0
    %715 = vmatprep.subr.mxu0 0.0
    %716 = vmatpush1.msra.mxu0 0.0
    %717 = vmatprep.subr.mxu0 0.0
    %718 = vmatpush1.msra.mxu0 0.0
    %719 = vmatprep.subr.mxu0 0.0
    %720 = vmatpush1.msra.mxu0 0.0
    %721 = vmatprep.subr.mxu0 0.0
    %722 = vmatpush1.msra.mxu0 0.0
    %723 = vmatprep.subr.mxu0 0.0
    %724 = vmatpush1.msra.mxu0 0.0
    %725 = vmatprep.subr.mxu0 0.0
    %726 = vmatpush1.msra.mxu0 0.0
    %727 = vmatprep.subr.mxu0 0.0
    %728 = vmatpush1.msra.mxu0 0.0
    %729 = vmatprep.subr.mxu0 0.0
    %730 = vmatpush1.msra.mxu0 0.0
    %731 = vmatprep.subr.mxu0 0.0
    %732 = vmatpush1.msra.mxu0 0.0
    %733 = vmatprep.subr.mxu0 0.0
    %734 = vmatpush1.msra.mxu0 0.0
    %735 = vmatprep.subr.mxu0 0.0
    %736 = vmatpush1.msra.mxu0 0.0
    %737 = vmatprep.subr.mxu0 0.0
    %738 = vmatpush1.msra.mxu0 0.0
    %739 = vmatprep.subr.mxu0 0.0
    %740 = vmatpush1.msra.mxu0 0.0
    %741 = vmatprep.subr.mxu0 0.0
    %742 = vmatpush1.msra.mxu0 0.0
    %743 = vmatprep.subr.mxu0 0.0
    %744 = vmatpush1.msra.mxu0 0.0
    %745 = vmatprep.subr.mxu0 0.0
    %746 = vmatpush1.msra.mxu0 %v529
    %747 = vmatprep.subr.mxu0 0.0
    %748 = vmatpush2.msra.mxu0 0.0
    %749 = vmatprep.subr.mxu0 0.0
    %750 = vmatpush2.msra.mxu0 0.0
    %751 = vmatprep.subr.mxu0 0.0
    %752 = vmatpush2.msra.mxu0 0.0
    %753 = vmatprep.subr.mxu0 0.0
    %754 = vmatpush2.msra.mxu0 0.0
    %755 = vmatprep.subr.mxu0 0.0
    %756 = vmatpush2.msra.mxu0 0.0
    %757 = vmatprep.subr.mxu0 0.0
    %758 = vmatpush2.msra.mxu0 0.0
    %759 = vmatprep.subr.mxu0 0.0
    %760 = vmatpush2.msra.mxu0 0.0
    %761 = vmatprep.subr.mxu0 0.0
    %762 = vmatpush2.msra.mxu0 0.0
    %763 = vmatprep.subr.mxu0 0.0
    %764 = vmatpush2.msra.mxu0 0.0
    %765 = vmatprep.subr.mxu0 0.0
    %766 = vmatpush2.msra.mxu0 0.0
    %767 = vmatprep.subr.mxu0 0.0
    %768 = vmatpush2.msra.mxu0 0.0
    %769 = vmatprep.subr.mxu0 0.0
    %770 = vmatpush2.msra.mxu0 0.0
    %771 = vmatprep.subr.mxu0 0.0
    %772 = vmatpush2.msra.mxu0 0.0
    %773 = vmatprep.subr.mxu0 0.0
    %774 = vmatpush2.msra.mxu0 0.0
    %775 = vmatprep.subr.mxu0 0.0
    %776 = vmatpush2.msra.mxu0 0.0
    %777 = vmatprep.subr.mxu0 0.0
    %778 = vmatpush2.msra.mxu0 0.0
    %779 = vmatprep.mubr.f32.mxu0 0.0
    %780 = vmatmul.mubr.f32.gmra.mxu0 %v713
    %v781 = vpop.f32.mrf.mxu0
    %v782 = vadd.f32 0.0, %v781
    %v783 = vpop.f32.mrf.mxu0
    %784 = vdwg.mxu0
    %v786 = vsel %vm537, %v711, 0
    %788 = vmatprep.subr.mxu0 0.0
    %789 = vmatpush1.msra.mxu0 0.0
    %790 = vmatprep.subr.mxu0 0.0
    %791 = vmatpush1.msra.mxu0 0.0
    %792 = vmatprep.subr.mxu0 0.0
    %793 = vmatpush1.msra.mxu0 0.0
    %794 = vmatprep.subr.mxu0 0.0
    %795 = vmatpush1.msra.mxu0 0.0
    %796 = vmatprep.subr.mxu0 0.0
    %797 = vmatpush1.msra.mxu0 0.0
    %798 = vmatprep.subr.mxu0 0.0
    %799 = vmatpush1.msra.mxu0 0.0
    %800 = vmatprep.subr.mxu0 0.0
    %801 = vmatpush1.msra.mxu0 0.0
    %802 = vmatprep.subr.mxu0 0.0
    %803 = vmatpush1.msra.mxu0 0.0
    %804 = vmatprep.subr.mxu0 0.0
    %805 = vmatpush1.msra.mxu0 0.0
    %806 = vmatprep.subr.mxu0 0.0
    %807 = vmatpush1.msra.mxu0 0.0
    %808 = vmatprep.subr.mxu0 0.0
    %809 = vmatpush1.msra.mxu0 0.0
    %810 = vmatprep.subr.mxu0 0.0
    %811 = vmatpush1.msra.mxu0 0.0
    %812 = vmatprep.subr.mxu0 0.0
    %813 = vmatpush1.msra.mxu0 0.0
    %814 = vmatprep.subr.mxu0 0.0
    %815 = vmatpush1.msra.mxu0 0.0
    %816 = vmatprep.subr.mxu0 0.0
    %817 = vmatpush1.msra.mxu0 0.0
    %818 = vmatprep.subr.mxu0 0.0
    %819 = vmatpush1.msra.mxu0 %v534
    %820 = vmatprep.subr.mxu0 0.0
    %821 = vmatpush2.msra.mxu0 0.0
    %822 = vmatprep.subr.mxu0 0.0
    %823 = vmatpush2.msra.mxu0 0.0
    %824 = vmatprep.subr.mxu0 0.0
    %825 = vmatpush2.msra.mxu0 0.0
    %826 = vmatprep.subr.mxu0 0.0
    %827 = vmatpush2.msra.mxu0 0.0
    %828 = vmatprep.subr.mxu0 0.0
    %829 = vmatpush2.msra.mxu0 0.0
    %830 = vmatprep.subr.mxu0 0.0
    %831 = vmatpush2.msra.mxu0 0.0
    %832 = vmatprep.subr.mxu0 0.0
    %833 = vmatpush2.msra.mxu0 0.0
    %834 = vmatprep.subr.mxu0 0.0
    %835 = vmatpush2.msra.mxu0 0.0
    %836 = vmatprep.subr.mxu0 0.0
    %837 = vmatpush2.msra.mxu0 0.0
    %838 = vmatprep.subr.mxu0 0.0
    %839 = vmatpush2.msra.mxu0 0.0
    %840 = vmatprep.subr.mxu0 0.0
    %841 = vmatpush2.msra.mxu0 0.0
    %842 = vmatprep.subr.mxu0 0.0
    %843 = vmatpush2.msra.mxu0 0.0
    %844 = vmatprep.subr.mxu0 0.0
    %845 = vmatpush2.msra.mxu0 0.0
    %846 = vmatprep.subr.mxu0 0.0
    %847 = vmatpush2.msra.mxu0 0.0
    %848 = vmatprep.subr.mxu0 0.0
    %849 = vmatpush2.msra.mxu0 0.0
    %850 = vmatprep.subr.mxu0 0.0
    %851 = vmatpush2.msra.mxu0 0.0
    %852 = vmatprep.mubr.f32.mxu0 0.0
    %853 = vmatmul.mubr.f32.gmra.mxu0 %v786
    %v854 = vpop.f32.mrf.mxu0
    %v855 = vadd.f32 0.0, %v854
    %v856 = vpop.f32.mrf.mxu0
    %857 = vdwg.mxu0
    %858 = vrot.lane.b32.xlu0 %v359, 120
    %v859 = vpop.permute.xlu0 %858
    %860 = vrot.lane.b32.xlu0 %v444, 120
    %v861 = vpop.permute.xlu0 %860
    %v862 = vsel %vm537, %v859, 0
    %v864 = vsel %vm537, %v861, 0
    %866 = vmatprep.subr.mxu0 0.0
    %867 = vmatpush1.xpose.msra.mxu0 0.0
    %868 = vmatprep.subr.mxu0 0.0
    %869 = vmatpush1.xpose.msra.mxu0 0.0
    %870 = vmatprep.subr.mxu0 0.0
    %871 = vmatpush1.xpose.msra.mxu0 0.0
    %872 = vmatprep.subr.mxu0 0.0
    %873 = vmatpush1.xpose.msra.mxu0 0.0
    %874 = vmatprep.subr.mxu0 0.0
    %875 = vmatpush1.xpose.msra.mxu0 0.0
    %876 = vmatprep.subr.mxu0 0.0
    %877 = vmatpush1.xpose.msra.mxu0 0.0
    %878 = vmatprep.subr.mxu0 0.0
    %879 = vmatpush1.xpose.msra.mxu0 0.0
    %880 = vmatprep.subr.mxu0 0.0
    %881 = vmatpush1.xpose.msra.mxu0 0.0
    %882 = vmatprep.subr.mxu0 0.0
    %883 = vmatpush1.xpose.msra.mxu0 0.0
    %884 = vmatprep.subr.mxu0 0.0
    %885 = vmatpush1.xpose.msra.mxu0 0.0
    %886 = vmatprep.subr.mxu0 0.0
    %887 = vmatpush1.xpose.msra.mxu0 0.0
    %888 = vmatprep.subr.mxu0 0.0
    %889 = vmatpush1.xpose.msra.mxu0 0.0
    %890 = vmatprep.subr.mxu0 0.0
    %891 = vmatpush1.xpose.msra.mxu0 0.0
    %892 = vmatprep.subr.mxu0 0.0
    %893 = vmatpush1.xpose.msra.mxu0 0.0
    %894 = vmatprep.subr.mxu0 0.0
    %895 = vmatpush1.xpose.msra.mxu0 0.0
    %896 = vmatprep.subr.mxu0 0.0
    %897 = vmatpush1.xpose.msra.mxu0 %v864
    %898 = vmatprep.subr.mxu0 0.0
    %899 = vmatpush2.xpose.msra.mxu0 0.0
    %900 = vmatprep.subr.mxu0 0.0
    %901 = vmatpush2.xpose.msra.mxu0 0.0
    %902 = vmatprep.subr.mxu0 0.0
    %903 = vmatpush2.xpose.msra.mxu0 0.0
    %904 = vmatprep.subr.mxu0 0.0
    %905 = vmatpush2.xpose.msra.mxu0 0.0
    %906 = vmatprep.subr.mxu0 0.0
    %907 = vmatpush2.xpose.msra.mxu0 0.0
    %908 = vmatprep.subr.mxu0 0.0
    %909 = vmatpush2.xpose.msra.mxu0 0.0
    %910 = vmatprep.subr.mxu0 0.0
    %911 = vmatpush2.xpose.msra.mxu0 0.0
    %912 = vmatprep.subr.mxu0 0.0
    %913 = vmatpush2.xpose.msra.mxu0 0.0
    %914 = vmatprep.subr.mxu0 0.0
    %915 = vmatpush2.xpose.msra.mxu0 0.0
    %916 = vmatprep.subr.mxu0 0.0
    %917 = vmatpush2.xpose.msra.mxu0 0.0
    %918 = vmatprep.subr.mxu0 0.0
    %919 = vmatpush2.xpose.msra.mxu0 0.0
    %920 = vmatprep.subr.mxu0 0.0
    %921 = vmatpush2.xpose.msra.mxu0 0.0
    %922 = vmatprep.subr.mxu0 0.0
    %923 = vmatpush2.xpose.msra.mxu0 0.0
    %924 = vmatprep.subr.mxu0 0.0
    %925 = vmatpush2.xpose.msra.mxu0 0.0
    %926 = vmatprep.subr.mxu0 0.0
    %927 = vmatpush2.xpose.msra.mxu0 0.0
    %928 = vmatprep.subr.mxu0 0.0
    %929 = vmatpush2.xpose.msra.mxu0 0.0
    %930 = vmatprep.mubr.f32.mxu0 0.0
    %931 = vmatmul.mubr.f32.gmra.mxu0 %v862
    %v932 = vpop.f32.mrf.mxu0
    %v933 = vadd.f32 0.0, %v932
    %v934 = vpop.f32.mrf.mxu0
    %935 = vdwg.mxu0
    %936 = vrot.lane.b32.xlu0 %v364, 120
    %v937 = vpop.permute.xlu0 %936
    %938 = vrot.lane.b32.xlu0 %v449, 120
    %v939 = vpop.permute.xlu0 %938
    %v940 = vsel %vm537, %v937, 0
    %v942 = vsel %vm537, %v939, 0
    %944 = vmatprep.subr.mxu0 0.0
    %945 = vmatpush1.xpose.msra.mxu0 0.0
    %946 = vmatprep.subr.mxu0 0.0
    %947 = vmatpush1.xpose.msra.mxu0 0.0
    %948 = vmatprep.subr.mxu0 0.0
    %949 = vmatpush1.xpose.msra.mxu0 0.0
    %950 = vmatprep.subr.mxu0 0.0
    %951 = vmatpush1.xpose.msra.mxu0 0.0
    %952 = vmatprep.subr.mxu0 0.0
    %953 = vmatpush1.xpose.msra.mxu0 0.0
    %954 = vmatprep.subr.mxu0 0.0
    %955 = vmatpush1.xpose.msra.mxu0 0.0
    %956 = vmatprep.subr.mxu0 0.0
    %957 = vmatpush1.xpose.msra.mxu0 0.0
    %958 = vmatprep.subr.mxu0 0.0
    %959 = vmatpush1.xpose.msra.mxu0 0.0
    %960 = vmatprep.subr.mxu0 0.0
    %961 = vmatpush1.xpose.msra.mxu0 0.0
    %962 = vmatprep.subr.mxu0 0.0
    %963 = vmatpush1.xpose.msra.mxu0 0.0
    %964 = vmatprep.subr.mxu0 0.0
    %965 = vmatpush1.xpose.msra.mxu0 0.0
    %966 = vmatprep.subr.mxu0 0.0
    %967 = vmatpush1.xpose.msra.mxu0 0.0
    %968 = vmatprep.subr.mxu0 0.0
    %969 = vmatpush1.xpose.msra.mxu0 0.0
    %970 = vmatprep.subr.mxu0 0.0
    %971 = vmatpush1.xpose.msra.mxu0 0.0
    %972 = vmatprep.subr.mxu0 0.0
    %973 = vmatpush1.xpose.msra.mxu0 0.0
    %974 = vmatprep.subr.mxu0 0.0
    %975 = vmatpush1.xpose.msra.mxu0 %v942
    %976 = vmatprep.subr.mxu0 0.0
    %977 = vmatpush2.xpose.msra.mxu0 0.0
    %978 = vmatprep.subr.mxu0 0.0
    %979 = vmatpush2.xpose.msra.mxu0 0.0
    %980 = vmatprep.subr.mxu0 0.0
    %981 = vmatpush2.xpose.msra.mxu0 0.0
    %982 = vmatprep.subr.mxu0 0.0
    %983 = vmatpush2.xpose.msra.mxu0 0.0
    %984 = vmatprep.subr.mxu0 0.0
    %985 = vmatpush2.xpose.msra.mxu0 0.0
    %986 = vmatprep.subr.mxu0 0.0
    %987 = vmatpush2.xpose.msra.mxu0 0.0
    %988 = vmatprep.subr.mxu0 0.0
    %989 = vmatpush2.xpose.msra.mxu0 0.0
    %990 = vmatprep.subr.mxu0 0.0
    %991 = vmatpush2.xpose.msra.mxu0 0.0
    %992 = vmatprep.subr.mxu0 0.0
    %993 = vmatpush2.xpose.msra.mxu0 0.0
    %994 = vmatprep.subr.mxu0 0.0
    %995 = vmatpush2.xpose.msra.mxu0 0.0
    %996 = vmatprep.subr.mxu0 0.0
    %997 = vmatpush2.xpose.msra.mxu0 0.0
    %998 = vmatprep.subr.mxu0 0.0
    %999 = vmatpush2.xpose.msra.mxu0 0.0
    %1000 = vmatprep.subr.mxu0 0.0
    %1001 = vmatpush2.xpose.msra.mxu0 0.0
    %1002 = vmatprep.subr.mxu0 0.0
    %1003 = vmatpush2.xpose.msra.mxu0 0.0
    %1004 = vmatprep.subr.mxu0 0.0
    %1005 = vmatpush2.xpose.msra.mxu0 0.0
    %1006 = vmatprep.subr.mxu0 0.0
    %1007 = vmatpush2.xpose.msra.mxu0 0.0
    %1008 = vmatprep.mubr.f32.mxu0 0.0
    %1009 = vmatmul.mubr.f32.gmra.mxu0 %v940
    %v1010 = vpop.f32.mrf.mxu0
    %v1011 = vadd.f32 0.0, %v1010
    %v1012 = vpop.f32.mrf.mxu0
    %1013 = vdwg.mxu0
    %v1014 = vsel %vm537, %v933, -inf
    %1015 = vmax.xlane.f32.xlu0 %v1014
    %v1016 = vpop.xlane.xlu0 %1015
    %v1017 = vsel %vm537, %v1011, -inf
    %1018 = vmax.xlane.f32.xlu0 %v1017
    %v1019 = vpop.xlane.xlu0 %1018
    %v1020 = vsub.f32 %v933, %v1016
    %v1021 = vsub.f32 %v1011, %v1019
    %v1022 = vmul.f32 %v1020, 1.442695
    %v1023 = vpow.pop %v1022
    %v1024 = vmul.f32 %v1021, 1.442695
    %v1025 = vpow.pop %v1024
    %v1026 = vsel %vm537, %v1023, 0.0
    %1027 = vadd.xlane.f32.xlu0 %v1026
    %v1028 = vpop.xlane.xlu0 %1027
    %v1029 = vsel %vm537, %v1025, 0.0
    %1030 = vadd.xlane.f32.xlu0 %v1029
    %v1031 = vpop.xlane.xlu0 %1030
    %v1032 = vrcp.pop %v1028
    %v1033 = vrcp.pop %v1031
    %v1034 = vmul.f32 %v1023, %v1032
    %v1035 = vmul.f32 %v1025, %v1033
    %1037 = vrot.lane.b32.xlu0 %v529, 120
    %v1038 = vpop.permute.xlu0 %1037
    %v1041 = vsel %vm537, %v1034, 0
    %1043 = vmatprep.subr.mxu0 0.0
    %1044 = vmatpush1.msra.mxu0 0.0
    %1045 = vmatprep.subr.mxu0 0.0
    %1046 = vmatpush1.msra.mxu0 0.0
    %1047 = vmatprep.subr.mxu0 0.0
    %1048 = vmatpush1.msra.mxu0 0.0
    %1049 = vmatprep.subr.mxu0 0.0
    %1050 = vmatpush1.msra.mxu0 0.0
    %1051 = vmatprep.subr.mxu0 0.0
    %1052 = vmatpush1.msra.mxu0 0.0
    %1053 = vmatprep.subr.mxu0 0.0
    %1054 = vmatpush1.msra.mxu0 0.0
    %1055 = vmatprep.subr.mxu0 0.0
    %1056 = vmatpush1.msra.mxu0 0.0
    %1057 = vmatprep.subr.mxu0 0.0
    %1058 = vmatpush1.msra.mxu0 0.0
    %1059 = vmatprep.subr.mxu0 0.0
    %1060 = vmatpush1.msra.mxu0 0.0
    %1061 = vmatprep.subr.mxu0 0.0
    %1062 = vmatpush1.msra.mxu0 0.0
    %1063 = vmatprep.subr.mxu0 0.0
    %1064 = vmatpush1.msra.mxu0 0.0
    %1065 = vmatprep.subr.mxu0 0.0
    %1066 = vmatpush1.msra.mxu0 0.0
    %1067 = vmatprep.subr.mxu0 0.0
    %1068 = vmatpush1.msra.mxu0 0.0
    %1069 = vmatprep.subr.mxu0 0.0
    %1070 = vmatpush1.msra.mxu0 0.0
    %1071 = vmatprep.subr.mxu0 0.0
    %1072 = vmatpush1.msra.mxu0 0.0
    %1073 = vmatprep.subr.mxu0 0.0
    %1074 = vmatpush1.msra.mxu0 %v1038
    %1075 = vmatprep.subr.mxu0 0.0
    %1076 = vmatpush2.msra.mxu0 0.0
    %1077 = vmatprep.subr.mxu0 0.0
    %1078 = vmatpush2.msra.mxu0 0.0
    %1079 = vmatprep.subr.mxu0 0.0
    %1080 = vmatpush2.msra.mxu0 0.0
    %1081 = vmatprep.subr.mxu0 0.0
    %1082 = vmatpush2.msra.mxu0 0.0
    %1083 = vmatprep.subr.mxu0 0.0
    %1084 = vmatpush2.msra.mxu0 0.0
    %1085 = vmatprep.subr.mxu0 0.0
    %1086 = vmatpush2.msra.mxu0 0.0
    %1087 = vmatprep.subr.mxu0 0.0
    %1088 = vmatpush2.msra.mxu0 0.0
    %1089 = vmatprep.subr.mxu0 0.0
    %1090 = vmatpush2.msra.mxu0 0.0
    %1091 = vmatprep.subr.mxu0 0.0
    %1092 = vmatpush2.msra.mxu0 0.0
    %1093 = vmatprep.subr.mxu0 0.0
    %1094 = vmatpush2.msra.mxu0 0.0
    %1095 = vmatprep.subr.mxu0 0.0
    %1096 = vmatpush2.msra.mxu0 0.0
    %1097 = vmatprep.subr.mxu0 0.0
    %1098 = vmatpush2.msra.mxu0 0.0
    %1099 = vmatprep.subr.mxu0 0.0
    %1100 = vmatpush2.msra.mxu0 0.0
    %1101 = vmatprep.subr.mxu0 0.0
    %1102 = vmatpush2.msra.mxu0 0.0
    %1103 = vmatprep.subr.mxu0 0.0
    %1104 = vmatpush2.msra.mxu0 0.0
    %1105 = vmatprep.subr.mxu0 0.0
    %1106 = vmatpush2.msra.mxu0 0.0
    %1107 = vmatprep.mubr.f32.mxu0 0.0
    %1108 = vmatmul.mubr.f32.gmra.mxu0 %v1041
    %v1109 = vpop.f32.mrf.mxu0
    %v1110 = vadd.f32 0.0, %v1109
    %v1111 = vpop.f32.mrf.mxu0
    %1112 = vdwg.mxu0
    %1114 = vrot.lane.b32.xlu0 %v534, 120
    %v1115 = vpop.permute.xlu0 %1114
    %v1118 = vsel %vm537, %v1035, 0
    %1120 = vmatprep.subr.mxu0 0.0
    %1121 = vmatpush1.msra.mxu0 0.0
    %1122 = vmatprep.subr.mxu0 0.0
    %1123 = vmatpush1.msra.mxu0 0.0
    %1124 = vmatprep.subr.mxu0 0.0
    %1125 = vmatpush1.msra.mxu0 0.0
    %1126 = vmatprep.subr.mxu0 0.0
    %1127 = vmatpush1.msra.mxu0 0.0
    %1128 = vmatprep.subr.mxu0 0.0
    %1129 = vmatpush1.msra.mxu0 0.0
    %1130 = vmatprep.subr.mxu0 0.0
    %1131 = vmatpush1.msra.mxu0 0.0
    %1132 = vmatprep.subr.mxu0 0.0
    %1133 = vmatpush1.msra.mxu0 0.0
    %1134 = vmatprep.subr.mxu0 0.0
    %1135 = vmatpush1.msra.mxu0 0.0
    %1136 = vmatprep.subr.mxu0 0.0
    %1137 = vmatpush1.msra.mxu0 0.0
    %1138 = vmatprep.subr.mxu0 0.0
    %1139 = vmatpush1.msra.mxu0 0.0
    %1140 = vmatprep.subr.mxu0 0.0
    %1141 = vmatpush1.msra.mxu0 0.0
    %1142 = vmatprep.subr.mxu0 0.0
    %1143 = vmatpush1.msra.mxu0 0.0
    %1144 = vmatprep.subr.mxu0 0.0
    %1145 = vmatpush1.msra.mxu0 0.0
    %1146 = vmatprep.subr.mxu0 0.0
    %1147 = vmatpush1.msra.mxu0 0.0
    %1148 = vmatprep.subr.mxu0 0.0
    %1149 = vmatpush1.msra.mxu0 0.0
    %1150 = vmatprep.subr.mxu0 0.0
    %1151 = vmatpush1.msra.mxu0 %v1115
    %1152 = vmatprep.subr.mxu0 0.0
    %1153 = vmatpush2.msra.mxu0 0.0
    %1154 = vmatprep.subr.mxu0 0.0
    %1155 = vmatpush2.msra.mxu0 0.0
    %1156 = vmatprep.subr.mxu0 0.0
    %1157 = vmatpush2.msra.mxu0 0.0
    %1158 = vmatprep.subr.mxu0 0.0
    %1159 = vmatpush2.msra.mxu0 0.0
    %1160 = vmatprep.subr.mxu0 0.0
    %1161 = vmatpush2.msra.mxu0 0.0
    %1162 = vmatprep.subr.mxu0 0.0
    %1163 = vmatpush2.msra.mxu0 0.0
    %1164 = vmatprep.subr.mxu0 0.0
    %1165 = vmatpush2.msra.mxu0 0.0
    %1166 = vmatprep.subr.mxu0 0.0
    %1167 = vmatpush2.msra.mxu0 0.0
    %1168 = vmatprep.subr.mxu0 0.0
    %1169 = vmatpush2.msra.mxu0 0.0
    %1170 = vmatprep.subr.mxu0 0.0
    %1171 = vmatpush2.msra.mxu0 0.0
    %1172 = vmatprep.subr.mxu0 0.0
    %1173 = vmatpush2.msra.mxu0 0.0
    %1174 = vmatprep.subr.mxu0 0.0
    %1175 = vmatpush2.msra.mxu0 0.0
    %1176 = vmatprep.subr.mxu0 0.0
    %1177 = vmatpush2.msra.mxu0 0.0
    %1178 = vmatprep.subr.mxu0 0.0
    %1179 = vmatpush2.msra.mxu0 0.0
    %1180 = vmatprep.subr.mxu0 0.0
    %1181 = vmatpush2.msra.mxu0 0.0
    %1182 = vmatprep.subr.mxu0 0.0
    %1183 = vmatpush2.msra.mxu0 0.0
    %1184 = vmatprep.mubr.f32.mxu0 0.0
    %1185 = vmatmul.mubr.f32.gmra.mxu0 %v1118
    %v1186 = vpop.f32.mrf.mxu0
    %v1187 = vadd.f32 0.0, %v1186
    %v1188 = vpop.f32.mrf.mxu0
    %1189 = vdwg.mxu0
    %1190 = vrot.lane.b32.xlu0 %v359, 112
    %v1191 = vpop.permute.xlu0 %1190
    %1192 = vrot.lane.b32.xlu0 %v444, 112
    %v1193 = vpop.permute.xlu0 %1192
    %v1194 = vsel %vm537, %v1191, 0
    %v1196 = vsel %vm537, %v1193, 0
    %1198 = vmatprep.subr.mxu0 0.0
    %1199 = vmatpush1.xpose.msra.mxu0 0.0
    %1200 = vmatprep.subr.mxu0 0.0
    %1201 = vmatpush1.xpose.msra.mxu0 0.0
    %1202 = vmatprep.subr.mxu0 0.0
    %1203 = vmatpush1.xpose.msra.mxu0 0.0
    %1204 = vmatprep.subr.mxu0 0.0
    %1205 = vmatpush1.xpose.msra.mxu0 0.0
    %1206 = vmatprep.subr.mxu0 0.0
    %1207 = vmatpush1.xpose.msra.mxu0 0.0
    %1208 = vmatprep.subr.mxu0 0.0
    %1209 = vmatpush1.xpose.msra.mxu0 0.0
    %1210 = vmatprep.subr.mxu0 0.0
    %1211 = vmatpush1.xpose.msra.mxu0 0.0
    %1212 = vmatprep.subr.mxu0 0.0
    %1213 = vmatpush1.xpose.msra.mxu0 0.0
    %1214 = vmatprep.subr.mxu0 0.0
    %1215 = vmatpush1.xpose.msra.mxu0 0.0
    %1216 = vmatprep.subr.mxu0 0.0
    %1217 = vmatpush1.xpose.msra.mxu0 0.0
    %1218 = vmatprep.subr.mxu0 0.0
    %1219 = vmatpush1.xpose.msra.mxu0 0.0
    %1220 = vmatprep.subr.mxu0 0.0
    %1221 = vmatpush1.xpose.msra.mxu0 0.0
    %1222 = vmatprep.subr.mxu0 0.0
    %1223 = vmatpush1.xpose.msra.mxu0 0.0
    %1224 = vmatprep.subr.mxu0 0.0
    %1225 = vmatpush1.xpose.msra.mxu0 0.0
    %1226 = vmatprep.subr.mxu0 0.0
    %1227 = vmatpush1.xpose.msra.mxu0 0.0
    %1228 = vmatprep.subr.mxu0 0.0
    %1229 = vmatpush1.xpose.msra.mxu0 %v1196
    %1230 = vmatprep.subr.mxu0 0.0
    %1231 = vmatpush2.xpose.msra.mxu0 0.0
    %1232 = vmatprep.subr.mxu0 0.0
    %1233 = vmatpush2.xpose.msra.mxu0 0.0
    %1234 = vmatprep.subr.mxu0 0.0
    %1235 = vmatpush2.xpose.msra.mxu0 0.0
    %1236 = vmatprep.subr.mxu0 0.0
    %1237 = vmatpush2.xpose.msra.mxu0 0.0
    %1238 = vmatprep.subr.mxu0 0.0
    %1239 = vmatpush2.xpose.msra.mxu0 0.0
    %1240 = vmatprep.subr.mxu0 0.0
    %1241 = vmatpush2.xpose.msra.mxu0 0.0
    %1242 = vmatprep.subr.mxu0 0.0
    %1243 = vmatpush2.xpose.msra.mxu0 0.0
    %1244 = vmatprep.subr.mxu0 0.0
    %1245 = vmatpush2.xpose.msra.mxu0 0.0
    %1246 = vmatprep.subr.mxu0 0.0
    %1247 = vmatpush2.xpose.msra.mxu0 0.0
    %1248 = vmatprep.subr.mxu0 0.0
    %1249 = vmatpush2.xpose.msra.mxu0 0.0
    %1250 = vmatprep.subr.mxu0 0.0
    %1251 = vmatpush2.xpose.msra.mxu0 0.0
    %1252 = vmatprep.subr.mxu0 0.0
    %1253 = vmatpush2.xpose.msra.mxu0 0.0
    %1254 = vmatprep.subr.mxu0 0.0
    %1255 = vmatpush2.xpose.msra.mxu0 0.0
    %1256 = vmatprep.subr.mxu0 0.0
    %1257 = vmatpush2.xpose.msra.mxu0 0.0
    %1258 = vmatprep.subr.mxu0 0.0
    %1259 = vmatpush2.xpose.msra.mxu0 0.0
    %1260 = vmatprep.subr.mxu0 0.0
    %1261 = vmatpush2.xpose.msra.mxu0 0.0
    %1262 = vmatprep.mubr.f32.mxu0 0.0
    %1263 = vmatmul.mubr.f32.gmra.mxu0 %v1194
    %v1264 = vpop.f32.mrf.mxu0
    %v1265 = vadd.f32 0.0, %v1264
    %v1266 = vpop.f32.mrf.mxu0
    %1267 = vdwg.mxu0
    %1268 = vrot.lane.b32.xlu0 %v364, 112
    %v1269 = vpop.permute.xlu0 %1268
    %1270 = vrot.lane.b32.xlu0 %v449, 112
    %v1271 = vpop.permute.xlu0 %1270
    %v1272 = vsel %vm537, %v1269, 0
    %v1274 = vsel %vm537, %v1271, 0
    %1276 = vmatprep.subr.mxu0 0.0
    %1277 = vmatpush1.xpose.msra.mxu0 0.0
    %1278 = vmatprep.subr.mxu0 0.0
    %1279 = vmatpush1.xpose.msra.mxu0 0.0
    %1280 = vmatprep.subr.mxu0 0.0
    %1281 = vmatpush1.xpose.msra.mxu0 0.0
    %1282 = vmatprep.subr.mxu0 0.0
    %1283 = vmatpush1.xpose.msra.mxu0 0.0
    %1284 = vmatprep.subr.mxu0 0.0
    %1285 = vmatpush1.xpose.msra.mxu0 0.0
    %1286 = vmatprep.subr.mxu0 0.0
    %1287 = vmatpush1.xpose.msra.mxu0 0.0
    %1288 = vmatprep.subr.mxu0 0.0
    %1289 = vmatpush1.xpose.msra.mxu0 0.0
    %1290 = vmatprep.subr.mxu0 0.0
    %1291 = vmatpush1.xpose.msra.mxu0 0.0
    %1292 = vmatprep.subr.mxu0 0.0
    %1293 = vmatpush1.xpose.msra.mxu0 0.0
    %1294 = vmatprep.subr.mxu0 0.0
    %1295 = vmatpush1.xpose.msra.mxu0 0.0
    %1296 = vmatprep.subr.mxu0 0.0
    %1297 = vmatpush1.xpose.msra.mxu0 0.0
    %1298 = vmatprep.subr.mxu0 0.0
    %1299 = vmatpush1.xpose.msra.mxu0 0.0
    %1300 = vmatprep.subr.mxu0 0.0
    %1301 = vmatpush1.xpose.msra.mxu0 0.0
    %1302 = vmatprep.subr.mxu0 0.0
    %1303 = vmatpush1.xpose.msra.mxu0 0.0
    %1304 = vmatprep.subr.mxu0 0.0
    %1305 = vmatpush1.xpose.msra.mxu0 0.0
    %1306 = vmatprep.subr.mxu0 0.0
    %1307 = vmatpush1.xpose.msra.mxu0 %v1274
    %1308 = vmatprep.subr.mxu0 0.0
    %1309 = vmatpush2.xpose.msra.mxu0 0.0
    %1310 = vmatprep.subr.mxu0 0.0
    %1311 = vmatpush2.xpose.msra.mxu0 0.0
    %1312 = vmatprep.subr.mxu0 0.0
    %1313 = vmatpush2.xpose.msra.mxu0 0.0
    %1314 = vmatprep.subr.mxu0 0.0
    %1315 = vmatpush2.xpose.msra.mxu0 0.0
    %1316 = vmatprep.subr.mxu0 0.0
    %1317 = vmatpush2.xpose.msra.mxu0 0.0
    %1318 = vmatprep.subr.mxu0 0.0
    %1319 = vmatpush2.xpose.msra.mxu0 0.0
    %1320 = vmatprep.subr.mxu0 0.0
    %1321 = vmatpush2.xpose.msra.mxu0 0.0
    %1322 = vmatprep.subr.mxu0 0.0
    %1323 = vmatpush2.xpose.msra.mxu0 0.0
    %1324 = vmatprep.subr.mxu0 0.0
    %1325 = vmatpush2.xpose.msra.mxu0 0.0
    %1326 = vmatprep.subr.mxu0 0.0
    %1327 = vmatpush2.xpose.msra.mxu0 0.0
    %1328 = vmatprep.subr.mxu0 0.0
    %1329 = vmatpush2.xpose.msra.mxu0 0.0
    %1330 = vmatprep.subr.mxu0 0.0
    %1331 = vmatpush2.xpose.msra.mxu0 0.0
    %1332 = vmatprep.subr.mxu0 0.0
    %1333 = vmatpush2.xpose.msra.mxu0 0.0
    %1334 = vmatprep.subr.mxu0 0.0
    %1335 = vmatpush2.xpose.msra.mxu0 0.0
    %1336 = vmatprep.subr.mxu0 0.0
    %1337 = vmatpush2.xpose.msra.mxu0 0.0
    %1338 = vmatprep.subr.mxu0 0.0
    %1339 = vmatpush2.xpose.msra.mxu0 0.0
    %1340 = vmatprep.mubr.f32.mxu0 0.0
    %1341 = vmatmul.mubr.f32.gmra.mxu0 %v1272
    %v1342 = vpop.f32.mrf.mxu0
    %v1343 = vadd.f32 0.0, %v1342
    %v1344 = vpop.f32.mrf.mxu0
    %1345 = vdwg.mxu0
    %v1346 = vsel %vm537, %v1265, -inf
    %1347 = vmax.xlane.f32.xlu0 %v1346
    %v1348 = vpop.xlane.xlu0 %1347
    %v1349 = vsel %vm537, %v1343, -inf
    %1350 = vmax.xlane.f32.xlu0 %v1349
    %v1351 = vpop.xlane.xlu0 %1350
    %v1352 = vsub.f32 %v1265, %v1348
    %v1353 = vsub.f32 %v1343, %v1351
    %v1354 = vmul.f32 %v1352, 1.442695
    %v1355 = vpow.pop %v1354
    %v1356 = vmul.f32 %v1353, 1.442695
    %v1357 = vpow.pop %v1356
    %v1358 = vsel %vm537, %v1355, 0.0
    %1359 = vadd.xlane.f32.xlu0 %v1358
    %v1360 = vpop.xlane.xlu0 %1359
    %v1361 = vsel %vm537, %v1357, 0.0
    %1362 = vadd.xlane.f32.xlu0 %v1361
    %v1363 = vpop.xlane.xlu0 %1362
    %v1364 = vrcp.pop %v1360
    %v1365 = vrcp.pop %v1363
    %v1366 = vmul.f32 %v1355, %v1364
    %v1367 = vmul.f32 %v1357, %v1365
    %1368 = vrot.lane.b32.xlu0 %v529, 112
    %v1369 = vpop.permute.xlu0 %1368
    %v1372 = vsel %vm537, %v1366, 0
    %1374 = vmatprep.subr.mxu0 0.0
    %1375 = vmatpush1.msra.mxu0 0.0
    %1376 = vmatprep.subr.mxu0 0.0
    %1377 = vmatpush1.msra.mxu0 0.0
    %1378 = vmatprep.subr.mxu0 0.0
    %1379 = vmatpush1.msra.mxu0 0.0
    %1380 = vmatprep.subr.mxu0 0.0
    %1381 = vmatpush1.msra.mxu0 0.0
    %1382 = vmatprep.subr.mxu0 0.0
    %1383 = vmatpush1.msra.mxu0 0.0
    %1384 = vmatprep.subr.mxu0 0.0
    %1385 = vmatpush1.msra.mxu0 0.0
    %1386 = vmatprep.subr.mxu0 0.0
    %1387 = vmatpush1.msra.mxu0 0.0
    %1388 = vmatprep.subr.mxu0 0.0
    %1389 = vmatpush1.msra.mxu0 0.0
    %1390 = vmatprep.subr.mxu0 0.0
    %1391 = vmatpush1.msra.mxu0 0.0
    %1392 = vmatprep.subr.mxu0 0.0
    %1393 = vmatpush1.msra.mxu0 0.0
    %1394 = vmatprep.subr.mxu0 0.0
    %1395 = vmatpush1.msra.mxu0 0.0
    %1396 = vmatprep.subr.mxu0 0.0
    %1397 = vmatpush1.msra.mxu0 0.0
    %1398 = vmatprep.subr.mxu0 0.0
    %1399 = vmatpush1.msra.mxu0 0.0
    %1400 = vmatprep.subr.mxu0 0.0
    %1401 = vmatpush1.msra.mxu0 0.0
    %1402 = vmatprep.subr.mxu0 0.0
    %1403 = vmatpush1.msra.mxu0 0.0
    %1404 = vmatprep.subr.mxu0 0.0
    %1405 = vmatpush1.msra.mxu0 %v1369
    %1406 = vmatprep.subr.mxu0 0.0
    %1407 = vmatpush2.msra.mxu0 0.0
    %1408 = vmatprep.subr.mxu0 0.0
    %1409 = vmatpush2.msra.mxu0 0.0
    %1410 = vmatprep.subr.mxu0 0.0
    %1411 = vmatpush2.msra.mxu0 0.0
    %1412 = vmatprep.subr.mxu0 0.0
    %1413 = vmatpush2.msra.mxu0 0.0
    %1414 = vmatprep.subr.mxu0 0.0
    %1415 = vmatpush2.msra.mxu0 0.0
    %1416 = vmatprep.subr.mxu0 0.0
    %1417 = vmatpush2.msra.mxu0 0.0
    %1418 = vmatprep.subr.mxu0 0.0
    %1419 = vmatpush2.msra.mxu0 0.0
    %1420 = vmatprep.subr.mxu0 0.0
    %1421 = vmatpush2.msra.mxu0 0.0
    %1422 = vmatprep.subr.mxu0 0.0
    %1423 = vmatpush2.msra.mxu0 0.0
    %1424 = vmatprep.subr.mxu0 0.0
    %1425 = vmatpush2.msra.mxu0 0.0
    %1426 = vmatprep.subr.mxu0 0.0
    %1427 = vmatpush2.msra.mxu0 0.0
    %1428 = vmatprep.subr.mxu0 0.0
    %1429 = vmatpush2.msra.mxu0 0.0
    %1430 = vmatprep.subr.mxu0 0.0
    %1431 = vmatpush2.msra.mxu0 0.0
    %1432 = vmatprep.subr.mxu0 0.0
    %1433 = vmatpush2.msra.mxu0 0.0
    %1434 = vmatprep.subr.mxu0 0.0
    %1435 = vmatpush2.msra.mxu0 0.0
    %1436 = vmatprep.subr.mxu0 0.0
    %1437 = vmatpush2.msra.mxu0 0.0
    %1438 = vmatprep.mubr.f32.mxu0 0.0
    %1439 = vmatmul.mubr.f32.gmra.mxu0 %v1372
    %v1440 = vpop.f32.mrf.mxu0
    %v1441 = vadd.f32 0.0, %v1440
    %v1442 = vpop.f32.mrf.mxu0
    %1443 = vdwg.mxu0
    %1444 = vrot.lane.b32.xlu0 %v534, 112
    %v1445 = vpop.permute.xlu0 %1444
    %v1448 = vsel %vm537, %v1367, 0
    %1450 = vmatprep.subr.mxu0 0.0
    %1451 = vmatpush1.msra.mxu0 0.0
    %1452 = vmatprep.subr.mxu0 0.0
    %1453 = vmatpush1.msra.mxu0 0.0
    %1454 = vmatprep.subr.mxu0 0.0
    %1455 = vmatpush1.msra.mxu0 0.0
    %1456 = vmatprep.subr.mxu0 0.0
    %1457 = vmatpush1.msra.mxu0 0.0
    %1458 = vmatprep.subr.mxu0 0.0
    %1459 = vmatpush1.msra.mxu0 0.0
    %1460 = vmatprep.subr.mxu0 0.0
    %1461 = vmatpush1.msra.mxu0 0.0
    %1462 = vmatprep.subr.mxu0 0.0
    %1463 = vmatpush1.msra.mxu0 0.0
    %1464 = vmatprep.subr.mxu0 0.0
    %1465 = vmatpush1.msra.mxu0 0.0
    %1466 = vmatprep.subr.mxu0 0.0
    %1467 = vmatpush1.msra.mxu0 0.0
    %1468 = vmatprep.subr.mxu0 0.0
    %1469 = vmatpush1.msra.mxu0 0.0
    %1470 = vmatprep.subr.mxu0 0.0
    %1471 = vmatpush1.msra.mxu0 0.0
    %1472 = vmatprep.subr.mxu0 0.0
    %1473 = vmatpush1.msra.mxu0 0.0
    %1474 = vmatprep.subr.mxu0 0.0
    %1475 = vmatpush1.msra.mxu0 0.0
    %1476 = vmatprep.subr.mxu0 0.0
    %1477 = vmatpush1.msra.mxu0 0.0
    %1478 = vmatprep.subr.mxu0 0.0
    %1479 = vmatpush1.msra.mxu0 0.0
    %1480 = vmatprep.subr.mxu0 0.0
    %1481 = vmatpush1.msra.mxu0 %v1445
    %1482 = vmatprep.subr.mxu0 0.0
    %1483 = vmatpush2.msra.mxu0 0.0
    %1484 = vmatprep.subr.mxu0 0.0
    %1485 = vmatpush2.msra.mxu0 0.0
    %1486 = vmatprep.subr.mxu0 0.0
    %1487 = vmatpush2.msra.mxu0 0.0
    %1488 = vmatprep.subr.mxu0 0.0
    %1489 = vmatpush2.msra.mxu0 0.0
    %1490 = vmatprep.subr.mxu0 0.0
    %1491 = vmatpush2.msra.mxu0 0.0
    %1492 = vmatprep.subr.mxu0 0.0
    %1493 = vmatpush2.msra.mxu0 0.0
    %1494 = vmatprep.subr.mxu0 0.0
    %1495 = vmatpush2.msra.mxu0 0.0
    %1496 = vmatprep.subr.mxu0 0.0
    %1497 = vmatpush2.msra.mxu0 0.0
    %1498 = vmatprep.subr.mxu0 0.0
    %1499 = vmatpush2.msra.mxu0 0.0
    %1500 = vmatprep.subr.mxu0 0.0
    %1501 = vmatpush2.msra.mxu0 0.0
    %1502 = vmatprep.subr.mxu0 0.0
    %1503 = vmatpush2.msra.mxu0 0.0
    %1504 = vmatprep.subr.mxu0 0.0
    %1505 = vmatpush2.msra.mxu0 0.0
    %1506 = vmatprep.subr.mxu0 0.0
    %1507 = vmatpush2.msra.mxu0 0.0
    %1508 = vmatprep.subr.mxu0 0.0
    %1509 = vmatpush2.msra.mxu0 0.0
    %1510 = vmatprep.subr.mxu0 0.0
    %1511 = vmatpush2.msra.mxu0 0.0
    %1512 = vmatprep.subr.mxu0 0.0
    %1513 = vmatpush2.msra.mxu0 0.0
    %1514 = vmatprep.mubr.f32.mxu0 0.0
    %1515 = vmatmul.mubr.f32.gmra.mxu0 %v1448
    %v1516 = vpop.f32.mrf.mxu0
    %v1517 = vadd.f32 0.0, %v1516
    %v1518 = vpop.f32.mrf.mxu0
    %1519 = vdwg.mxu0
    %1520 = vrot.lane.b32.xlu0 %v359, 104
    %v1521 = vpop.permute.xlu0 %1520
    %1522 = vrot.lane.b32.xlu0 %v444, 104
    %v1523 = vpop.permute.xlu0 %1522
    %v1524 = vsel %vm537, %v1521, 0
    %v1526 = vsel %vm537, %v1523, 0
    %1528 = vmatprep.subr.mxu0 0.0
    %1529 = vmatpush1.xpose.msra.mxu0 0.0
    %1530 = vmatprep.subr.mxu0 0.0
    %1531 = vmatpush1.xpose.msra.mxu0 0.0
    %1532 = vmatprep.subr.mxu0 0.0
    %1533 = vmatpush1.xpose.msra.mxu0 0.0
    %1534 = vmatprep.subr.mxu0 0.0
    %1535 = vmatpush1.xpose.msra.mxu0 0.0
    %1536 = vmatprep.subr.mxu0 0.0
    %1537 = vmatpush1.xpose.msra.mxu0 0.0
    %1538 = vmatprep.subr.mxu0 0.0
    %1539 = vmatpush1.xpose.msra.mxu0 0.0
    %1540 = vmatprep.subr.mxu0 0.0
    %1541 = vmatpush1.xpose.msra.mxu0 0.0
    %1542 = vmatprep.subr.mxu0 0.0
    %1543 = vmatpush1.xpose.msra.mxu0 0.0
    %1544 = vmatprep.subr.mxu0 0.0
    %1545 = vmatpush1.xpose.msra.mxu0 0.0
    %1546 = vmatprep.subr.mxu0 0.0
    %1547 = vmatpush1.xpose.msra.mxu0 0.0
    %1548 = vmatprep.subr.mxu0 0.0
    %1549 = vmatpush1.xpose.msra.mxu0 0.0
    %1550 = vmatprep.subr.mxu0 0.0
    %1551 = vmatpush1.xpose.msra.mxu0 0.0
    %1552 = vmatprep.subr.mxu0 0.0
    %1553 = vmatpush1.xpose.msra.mxu0 0.0
    %1554 = vmatprep.subr.mxu0 0.0
    %1555 = vmatpush1.xpose.msra.mxu0 0.0
    %1556 = vmatprep.subr.mxu0 0.0
    %1557 = vmatpush1.xpose.msra.mxu0 0.0
    %1558 = vmatprep.subr.mxu0 0.0
    %1559 = vmatpush1.xpose.msra.mxu0 %v1526
    %1560 = vmatprep.subr.mxu0 0.0
    %1561 = vmatpush2.xpose.msra.mxu0 0.0
    %1562 = vmatprep.subr.mxu0 0.0
    %1563 = vmatpush2.xpose.msra.mxu0 0.0
    %1564 = vmatprep.subr.mxu0 0.0
    %1565 = vmatpush2.xpose.msra.mxu0 0.0
    %1566 = vmatprep.subr.mxu0 0.0
    %1567 = vmatpush2.xpose.msra.mxu0 0.0
    %1568 = vmatprep.subr.mxu0 0.0
    %1569 = vmatpush2.xpose.msra.mxu0 0.0
    %1570 = vmatprep.subr.mxu0 0.0
    %1571 = vmatpush2.xpose.msra.mxu0 0.0
    %1572 = vmatprep.subr.mxu0 0.0
    %1573 = vmatpush2.xpose.msra.mxu0 0.0
    %1574 = vmatprep.subr.mxu0 0.0
    %1575 = vmatpush2.xpose.msra.mxu0 0.0
    %1576 = vmatprep.subr.mxu0 0.0
    %1577 = vmatpush2.xpose.msra.mxu0 0.0
    %1578 = vmatprep.subr.mxu0 0.0
    %1579 = vmatpush2.xpose.msra.mxu0 0.0
    %1580 = vmatprep.subr.mxu0 0.0
    %1581 = vmatpush2.xpose.msra.mxu0 0.0
    %1582 = vmatprep.subr.mxu0 0.0
    %1583 = vmatpush2.xpose.msra.mxu0 0.0
    %1584 = vmatprep.subr.mxu0 0.0
    %1585 = vmatpush2.xpose.msra.mxu0 0.0
    %1586 = vmatprep.subr.mxu0 0.0
    %1587 = vmatpush2.xpose.msra.mxu0 0.0
    %1588 = vmatprep.subr.mxu0 0.0
    %1589 = vmatpush2.xpose.msra.mxu0 0.0
    %1590 = vmatprep.subr.mxu0 0.0
    %1591 = vmatpush2.xpose.msra.mxu0 0.0
    %1592 = vmatprep.mubr.f32.mxu0 0.0
    %1593 = vmatmul.mubr.f32.gmra.mxu0 %v1524
    %v1594 = vpop.f32.mrf.mxu0
    %v1595 = vadd.f32 0.0, %v1594
    %v1596 = vpop.f32.mrf.mxu0
    %1597 = vdwg.mxu0
    %1598 = vrot.lane.b32.xlu0 %v364, 104
    %v1599 = vpop.permute.xlu0 %1598
    %1600 = vrot.lane.b32.xlu0 %v449, 104
    %v1601 = vpop.permute.xlu0 %1600
    %v1602 = vsel %vm537, %v1599, 0
    %v1604 = vsel %vm537, %v1601, 0
    %1606 = vmatprep.subr.mxu0 0.0
    %1607 = vmatpush1.xpose.msra.mxu0 0.0
    %1608 = vmatprep.subr.mxu0 0.0
    %1609 = vmatpush1.xpose.msra.mxu0 0.0
    %1610 = vmatprep.subr.mxu0 0.0
    %1611 = vmatpush1.xpose.msra.mxu0 0.0
    %1612 = vmatprep.subr.mxu0 0.0
    %1613 = vmatpush1.xpose.msra.mxu0 0.0
    %1614 = vmatprep.subr.mxu0 0.0
    %1615 = vmatpush1.xpose.msra.mxu0 0.0
    %1616 = vmatprep.subr.mxu0 0.0
    %1617 = vmatpush1.xpose.msra.mxu0 0.0
    %1618 = vmatprep.subr.mxu0 0.0
    %1619 = vmatpush1.xpose.msra.mxu0 0.0
    %1620 = vmatprep.subr.mxu0 0.0
    %1621 = vmatpush1.xpose.msra.mxu0 0.0
    %1622 = vmatprep.subr.mxu0 0.0
    %1623 = vmatpush1.xpose.msra.mxu0 0.0
    %1624 = vmatprep.subr.mxu0 0.0
    %1625 = vmatpush1.xpose.msra.mxu0 0.0
    %1626 = vmatprep.subr.mxu0 0.0
    %1627 = vmatpush1.xpose.msra.mxu0 0.0
    %1628 = vmatprep.subr.mxu0 0.0
    %1629 = vmatpush1.xpose.msra.mxu0 0.0
    %1630 = vmatprep.subr.mxu0 0.0
    %1631 = vmatpush1.xpose.msra.mxu0 0.0
    %1632 = vmatprep.subr.mxu0 0.0
    %1633 = vmatpush1.xpose.msra.mxu0 0.0
    %1634 = vmatprep.subr.mxu0 0.0
    %1635 = vmatpush1.xpose.msra.mxu0 0.0
    %1636 = vmatprep.subr.mxu0 0.0
    %1637 = vmatpush1.xpose.msra.mxu0 %v1604
    %1638 = vmatprep.subr.mxu0 0.0
    %1639 = vmatpush2.xpose.msra.mxu0 0.0
    %1640 = vmatprep.subr.mxu0 0.0
    %1641 = vmatpush2.xpose.msra.mxu0 0.0
    %1642 = vmatprep.subr.mxu0 0.0
    %1643 = vmatpush2.xpose.msra.mxu0 0.0
    %1644 = vmatprep.subr.mxu0 0.0
    %1645 = vmatpush2.xpose.msra.mxu0 0.0
    %1646 = vmatprep.subr.mxu0 0.0
    %1647 = vmatpush2.xpose.msra.mxu0 0.0
    %1648 = vmatprep.subr.mxu0 0.0
    %1649 = vmatpush2.xpose.msra.mxu0 0.0
    %1650 = vmatprep.subr.mxu0 0.0
    %1651 = vmatpush2.xpose.msra.mxu0 0.0
    %1652 = vmatprep.subr.mxu0 0.0
    %1653 = vmatpush2.xpose.msra.mxu0 0.0
    %1654 = vmatprep.subr.mxu0 0.0
    %1655 = vmatpush2.xpose.msra.mxu0 0.0
    %1656 = vmatprep.subr.mxu0 0.0
    %1657 = vmatpush2.xpose.msra.mxu0 0.0
    %1658 = vmatprep.subr.mxu0 0.0
    %1659 = vmatpush2.xpose.msra.mxu0 0.0
    %1660 = vmatprep.subr.mxu0 0.0
    %1661 = vmatpush2.xpose.msra.mxu0 0.0
    %1662 = vmatprep.subr.mxu0 0.0
    %1663 = vmatpush2.xpose.msra.mxu0 0.0
    %1664 = vmatprep.subr.mxu0 0.0
    %1665 = vmatpush2.xpose.msra.mxu0 0.0
    %1666 = vmatprep.subr.mxu0 0.0
    %1667 = vmatpush2.xpose.msra.mxu0 0.0
    %1668 = vmatprep.subr.mxu0 0.0
    %1669 = vmatpush2.xpose.msra.mxu0 0.0
    %1670 = vmatprep.mubr.f32.mxu0 0.0
    %1671 = vmatmul.mubr.f32.gmra.mxu0 %v1602
    %v1672 = vpop.f32.mrf.mxu0
    %v1673 = vadd.f32 0.0, %v1672
    %v1674 = vpop.f32.mrf.mxu0
    %1675 = vdwg.mxu0
    %v1676 = vsel %vm537, %v1595, -inf
    %1677 = vmax.xlane.f32.xlu0 %v1676
    %v1678 = vpop.xlane.xlu0 %1677
    %v1679 = vsel %vm537, %v1673, -inf
    %1680 = vmax.xlane.f32.xlu0 %v1679
    %v1681 = vpop.xlane.xlu0 %1680
    %v1682 = vsub.f32 %v1595, %v1678
    %v1683 = vsub.f32 %v1673, %v1681
    %v1684 = vmul.f32 %v1682, 1.442695
    %v1685 = vpow.pop %v1684
    %v1686 = vmul.f32 %v1683, 1.442695
    %v1687 = vpow.pop %v1686
    %v1688 = vsel %vm537, %v1685, 0.0
    %1689 = vadd.xlane.f32.xlu0 %v1688
    %v1690 = vpop.xlane.xlu0 %1689
    %v1691 = vsel %vm537, %v1687, 0.0
    %1692 = vadd.xlane.f32.xlu0 %v1691
    %v1693 = vpop.xlane.xlu0 %1692
    %v1694 = vrcp.pop %v1690
    %v1695 = vrcp.pop %v1693
    %v1696 = vmul.f32 %v1685, %v1694
    %v1697 = vmul.f32 %v1687, %v1695
    %1698 = vrot.lane.b32.xlu0 %v529, 104
    %v1699 = vpop.permute.xlu0 %1698
    %v1702 = vsel %vm537, %v1696, 0
    %1704 = vmatprep.subr.mxu0 0.0
    %1705 = vmatpush1.msra.mxu0 0.0
    %1706 = vmatprep.subr.mxu0 0.0
    %1707 = vmatpush1.msra.mxu0 0.0
    %1708 = vmatprep.subr.mxu0 0.0
    %1709 = vmatpush1.msra.mxu0 0.0
    %1710 = vmatprep.subr.mxu0 0.0
    %1711 = vmatpush1.msra.mxu0 0.0
    %1712 = vmatprep.subr.mxu0 0.0
    %1713 = vmatpush1.msra.mxu0 0.0
    %1714 = vmatprep.subr.mxu0 0.0
    %1715 = vmatpush1.msra.mxu0 0.0
    %1716 = vmatprep.subr.mxu0 0.0
    %1717 = vmatpush1.msra.mxu0 0.0
    %1718 = vmatprep.subr.mxu0 0.0
    %1719 = vmatpush1.msra.mxu0 0.0
    %1720 = vmatprep.subr.mxu0 0.0
    %1721 = vmatpush1.msra.mxu0 0.0
    %1722 = vmatprep.subr.mxu0 0.0
    %1723 = vmatpush1.msra.mxu0 0.0
    %1724 = vmatprep.subr.mxu0 0.0
    %1725 = vmatpush1.msra.mxu0 0.0
    %1726 = vmatprep.subr.mxu0 0.0
    %1727 = vmatpush1.msra.mxu0 0.0
    %1728 = vmatprep.subr.mxu0 0.0
    %1729 = vmatpush1.msra.mxu0 0.0
    %1730 = vmatprep.subr.mxu0 0.0
    %1731 = vmatpush1.msra.mxu0 0.0
    %1732 = vmatprep.subr.mxu0 0.0
    %1733 = vmatpush1.msra.mxu0 0.0
    %1734 = vmatprep.subr.mxu0 0.0
    %1735 = vmatpush1.msra.mxu0 %v1699
    %1736 = vmatprep.subr.mxu0 0.0
    %1737 = vmatpush2.msra.mxu0 0.0
    %1738 = vmatprep.subr.mxu0 0.0
    %1739 = vmatpush2.msra.mxu0 0.0
    %1740 = vmatprep.subr.mxu0 0.0
    %1741 = vmatpush2.msra.mxu0 0.0
    %1742 = vmatprep.subr.mxu0 0.0
    %1743 = vmatpush2.msra.mxu0 0.0
    %1744 = vmatprep.subr.mxu0 0.0
    %1745 = vmatpush2.msra.mxu0 0.0
    %1746 = vmatprep.subr.mxu0 0.0
    %1747 = vmatpush2.msra.mxu0 0.0
    %1748 = vmatprep.subr.mxu0 0.0
    %1749 = vmatpush2.msra.mxu0 0.0
    %1750 = vmatprep.subr.mxu0 0.0
    %1751 = vmatpush2.msra.mxu0 0.0
    %1752 = vmatprep.subr.mxu0 0.0
    %1753 = vmatpush2.msra.mxu0 0.0
    %1754 = vmatprep.subr.mxu0 0.0
    %1755 = vmatpush2.msra.mxu0 0.0
    %1756 = vmatprep.subr.mxu0 0.0
    %1757 = vmatpush2.msra.mxu0 0.0
    %1758 = vmatprep.subr.mxu0 0.0
    %1759 = vmatpush2.msra.mxu0 0.0
    %1760 = vmatprep.subr.mxu0 0.0
    %1761 = vmatpush2.msra.mxu0 0.0
    %1762 = vmatprep.subr.mxu0 0.0
    %1763 = vmatpush2.msra.mxu0 0.0
    %1764 = vmatprep.subr.mxu0 0.0
    %1765 = vmatpush2.msra.mxu0 0.0
    %1766 = vmatprep.subr.mxu0 0.0
    %1767 = vmatpush2.msra.mxu0 0.0
    %1768 = vmatprep.mubr.f32.mxu0 0.0
    %1769 = vmatmul.mubr.f32.gmra.mxu0 %v1702
    %v1770 = vpop.f32.mrf.mxu0
    %v1771 = vadd.f32 0.0, %v1770
    %v1772 = vpop.f32.mrf.mxu0
    %1773 = vdwg.mxu0
    %1774 = vrot.lane.b32.xlu0 %v534, 104
    %v1775 = vpop.permute.xlu0 %1774
    %v1778 = vsel %vm537, %v1697, 0
    %1780 = vmatprep.subr.mxu0 0.0
    %1781 = vmatpush1.msra.mxu0 0.0
    %1782 = vmatprep.subr.mxu0 0.0
    %1783 = vmatpush1.msra.mxu0 0.0
    %1784 = vmatprep.subr.mxu0 0.0
    %1785 = vmatpush1.msra.mxu0 0.0
    %1786 = vmatprep.subr.mxu0 0.0
    %1787 = vmatpush1.msra.mxu0 0.0
    %1788 = vmatprep.subr.mxu0 0.0
    %1789 = vmatpush1.msra.mxu0 0.0
    %1790 = vmatprep.subr.mxu0 0.0
    %1791 = vmatpush1.msra.mxu0 0.0
    %1792 = vmatprep.subr.mxu0 0.0
    %1793 = vmatpush1.msra.mxu0 0.0
    %1794 = vmatprep.subr.mxu0 0.0
    %1795 = vmatpush1.msra.mxu0 0.0
    %1796 = vmatprep.subr.mxu0 0.0
    %1797 = vmatpush1.msra.mxu0 0.0
    %1798 = vmatprep.subr.mxu0 0.0
    %1799 = vmatpush1.msra.mxu0 0.0
    %1800 = vmatprep.subr.mxu0 0.0
    %1801 = vmatpush1.msra.mxu0 0.0
    %1802 = vmatprep.subr.mxu0 0.0
    %1803 = vmatpush1.msra.mxu0 0.0
    %1804 = vmatprep.subr.mxu0 0.0
    %1805 = vmatpush1.msra.mxu0 0.0
    %1806 = vmatprep.subr.mxu0 0.0
    %1807 = vmatpush1.msra.mxu0 0.0
    %1808 = vmatprep.subr.mxu0 0.0
    %1809 = vmatpush1.msra.mxu0 0.0
    %1810 = vmatprep.subr.mxu0 0.0
    %1811 = vmatpush1.msra.mxu0 %v1775
    %1812 = vmatprep.subr.mxu0 0.0
    %1813 = vmatpush2.msra.mxu0 0.0
    %1814 = vmatprep.subr.mxu0 0.0
    %1815 = vmatpush2.msra.mxu0 0.0
    %1816 = vmatprep.subr.mxu0 0.0
    %1817 = vmatpush2.msra.mxu0 0.0
    %1818 = vmatprep.subr.mxu0 0.0
    %1819 = vmatpush2.msra.mxu0 0.0
    %1820 = vmatprep.subr.mxu0 0.0
    %1821 = vmatpush2.msra.mxu0 0.0
    %1822 = vmatprep.subr.mxu0 0.0
    %1823 = vmatpush2.msra.mxu0 0.0
    %1824 = vmatprep.subr.mxu0 0.0
    %1825 = vmatpush2.msra.mxu0 0.0
    %1826 = vmatprep.subr.mxu0 0.0
    %1827 = vmatpush2.msra.mxu0 0.0
    %1828 = vmatprep.subr.mxu0 0.0
    %1829 = vmatpush2.msra.mxu0 0.0
    %1830 = vmatprep.subr.mxu0 0.0
    %1831 = vmatpush2.msra.mxu0 0.0
    %1832 = vmatprep.subr.mxu0 0.0
    %1833 = vmatpush2.msra.mxu0 0.0
    %1834 = vmatprep.subr.mxu0 0.0
    %1835 = vmatpush2.msra.mxu0 0.0
    %1836 = vmatprep.subr.mxu0 0.0
    %1837 = vmatpush2.msra.mxu0 0.0
    %1838 = vmatprep.subr.mxu0 0.0
    %1839 = vmatpush2.msra.mxu0 0.0
    %1840 = vmatprep.subr.mxu0 0.0
    %1841 = vmatpush2.msra.mxu0 0.0
    %1842 = vmatprep.subr.mxu0 0.0
    %1843 = vmatpush2.msra.mxu0 0.0
    %1844 = vmatprep.mubr.f32.mxu0 0.0
    %1845 = vmatmul.mubr.f32.gmra.mxu0 %v1778
    %v1846 = vpop.f32.mrf.mxu0
    %v1847 = vadd.f32 0.0, %v1846
    %v1848 = vpop.f32.mrf.mxu0
    %1849 = vdwg.mxu0
    %1852 = vrot.lane.b32.xlu0 %v1110, 8
    %v1853 = vpop.permute.xlu0 %1852
    %1854 = vrot.lane.b32.xlu0 %v1187, 8
    %v1855 = vpop.permute.xlu0 %1854
    %1860 = vrot.lane.b32.xlu0 %v1441, 16
    %v1861 = vpop.permute.xlu0 %1860
    %1862 = vrot.lane.b32.xlu0 %v1517, 16
    %v1863 = vpop.permute.xlu0 %1862
    %1868 = vrot.lane.b32.xlu0 %v1771, 24
    %v1869 = vpop.permute.xlu0 %1868
    %1870 = vrot.lane.b32.xlu0 %v1847, 24
    %v1871 = vpop.permute.xlu0 %1870
    %v1874 = vsel %vm537, %v782, %v1853
    %v1875 = vsel %vm537, %v855, %v1855
    %vm1876 = vcmask 130048
    %v1877 = vsel %vm1876, %v1874, %v1861
    %v1878 = vsel %vm1876, %v1875, %v1863
    %vm1879 = vcmask 195584
    %v1880 = vsel %vm1879, %v1877, %v1869
    %v1881 = vsel %vm1879, %v1878, %v1871
    %v1882 = vld [vmem:[#allocation13] sm:$0xff]
    %v1883 = vld [vmem:[#allocation13 + $0x8] sm:$0xff]
    %v1884 = vld [vmem:[#allocation13 + $0x10] sm:$0xff]
    %v1885 = vld [vmem:[#allocation13 + $0x18] sm:$0xff]
    %v1886 = vld [vmem:[%s9] sm:$0x1]
    %v1888 = vlaneseq
    %v1889 = vshrl.u32 %v1888, 7
    %v1890 = vsub.s32 0, %v1889
    %v1891 = vrot.slane %v1886, %v1890
    %v1894 = vsel %vm178, %v1880, 0
    %v1897 = vsel %vm178, %v1881, 0
    %1899 = vmatprep.subr.mxu0 0.0
    %1900 = vmatpush1.msra.mxu0 0.0
    %1901 = vmatprep.subr.mxu0 0.0
    %1902 = vmatpush1.msra.mxu0 0.0
    %1903 = vmatprep.subr.mxu0 0.0
    %1904 = vmatpush1.msra.mxu0 0.0
    %1905 = vmatprep.subr.mxu0 0.0
    %1906 = vmatpush1.msra.mxu0 0.0
    %1907 = vmatprep.subr.mxu0 0.0
    %1908 = vmatpush1.msra.mxu0 0.0
    %1909 = vmatprep.subr.mxu0 0.0
    %1910 = vmatpush1.msra.mxu0 0.0
    %1911 = vmatprep.subr.mxu0 0.0
    %1912 = vmatpush1.msra.mxu0 0.0
    %1913 = vmatprep.subr.mxu0 0.0
    %1914 = vmatpush1.msra.mxu0 0.0
    %1915 = vmatprep.subr.mxu0 0.0
    %1916 = vmatpush1.msra.mxu0 0.0
    %1917 = vmatprep.subr.mxu0 0.0
    %1918 = vmatpush1.msra.mxu0 0.0
    %1919 = vmatprep.subr.mxu0 0.0
    %1920 = vmatpush1.msra.mxu0 0.0
    %1921 = vmatprep.subr.mxu0 0.0
    %1922 = vmatpush1.msra.mxu0 0.0
    %1923 = vmatprep.subr.mxu0 0.0
    %1924 = vmatpush1.msra.mxu0 %v1885
    %1925 = vmatprep.subr.mxu0 0.0
    %1926 = vmatpush1.msra.mxu0 %v1884
    %1927 = vmatprep.subr.mxu0 0.0
    %1928 = vmatpush1.msra.mxu0 %v1883
    %1929 = vmatprep.subr.mxu0 0.0
    %1930 = vmatpush1.msra.mxu0 %v1882
    %1931 = vmatprep.subr.mxu0 0.0
    %1932 = vmatpush2.msra.mxu0 0.0
    %1933 = vmatprep.subr.mxu0 0.0
    %1934 = vmatpush2.msra.mxu0 0.0
    %1935 = vmatprep.subr.mxu0 0.0
    %1936 = vmatpush2.msra.mxu0 0.0
    %1937 = vmatprep.subr.mxu0 0.0
    %1938 = vmatpush2.msra.mxu0 0.0
    %1939 = vmatprep.subr.mxu0 0.0
    %1940 = vmatpush2.msra.mxu0 0.0
    %1941 = vmatprep.subr.mxu0 0.0
    %1942 = vmatpush2.msra.mxu0 0.0
    %1943 = vmatprep.subr.mxu0 0.0
    %1944 = vmatpush2.msra.mxu0 0.0
    %1945 = vmatprep.subr.mxu0 0.0
    %1946 = vmatpush2.msra.mxu0 0.0
    %1947 = vmatprep.subr.mxu0 0.0
    %1948 = vmatpush2.msra.mxu0 0.0
    %1949 = vmatprep.subr.mxu0 0.0
    %1950 = vmatpush2.msra.mxu0 0.0
    %1951 = vmatprep.subr.mxu0 0.0
    %1952 = vmatpush2.msra.mxu0 0.0
    %1953 = vmatprep.subr.mxu0 0.0
    %1954 = vmatpush2.msra.mxu0 0.0
    %1955 = vmatprep.subr.mxu0 0.0
    %1956 = vmatpush2.msra.mxu0 0.0
    %1957 = vmatprep.subr.mxu0 0.0
    %1958 = vmatpush2.msra.mxu0 0.0
    %1959 = vmatprep.subr.mxu0 0.0
    %1960 = vmatpush2.msra.mxu0 0.0
    %1961 = vmatprep.subr.mxu0 0.0
    %1962 = vmatpush2.msra.mxu0 0.0
    %1963 = vmatprep.mubr.f32.mxu0 0.0
    %1964 = vmatmul.mubr.f32.gmra.mxu0 %v1894
    %v1965 = vpop.f32.mrf.mxu0
    %v1966 = vadd.f32 %v1891, %v1965
    %v1967 = vpop.f32.mrf.mxu0
    %1968 = vmatprep.mubr.f32.mxu0 0.0
    %1969 = vmatmul.mubr.f32.gmra.mxu0 %v1897
    %v1970 = vpop.f32.mrf.mxu0
    %v1971 = vadd.f32 %v1891, %v1970
    %v1972 = vpop.f32.mrf.mxu0
    %1973 = vdwg.mxu0
    %v1974 = vadd.f32 %v1966, %v170
    %v1975 = vadd.f32 %v1971, %v171
    %v1976 = vld [vmem:[#allocation14] sm:$0xff]
    %v1977 = vld [vmem:[#allocation14 + $0x8] sm:$0xff]
    %v1978 = vld [vmem:[#allocation14 + $0x10] sm:$0xff]
    %v1979 = vld [vmem:[#allocation14 + $0x18] sm:$0xff]
    %v1980 = vld [vmem:[%s11] sm:$0x1]
    %v1982 = vlaneseq
    %v1983 = vshrl.u32 %v1982, 7
    %v1984 = vsub.s32 0, %v1983
    %v1985 = vrot.slane %v1980, %v1984
    %v1988 = vsel %vm178, %v1974, 0
    %v1991 = vsel %vm178, %v1975, 0
    %1993 = vmatprep.subr.mxu0 0.0
    %1994 = vmatpush1.msra.mxu0 0.0
    %1995 = vmatprep.subr.mxu0 0.0
    %1996 = vmatpush1.msra.mxu0 0.0
    %1997 = vmatprep.subr.mxu0 0.0
    %1998 = vmatpush1.msra.mxu0 0.0
    %1999 = vmatprep.subr.mxu0 0.0
    %2000 = vmatpush1.msra.mxu0 0.0
    %2001 = vmatprep.subr.mxu0 0.0
    %2002 = vmatpush1.msra.mxu0 0.0
    %2003 = vmatprep.subr.mxu0 0.0
    %2004 = vmatpush1.msra.mxu0 0.0
    %2005 = vmatprep.subr.mxu0 0.0
    %2006 = vmatpush1.msra.mxu0 0.0
    %2007 = vmatprep.subr.mxu0 0.0
    %2008 = vmatpush1.msra.mxu0 0.0
    %2009 = vmatprep.subr.mxu0 0.0
    %2010 = vmatpush1.msra.mxu0 0.0
    %2011 = vmatprep.subr.mxu0 0.0
    %2012 = vmatpush1.msra.mxu0 0.0
    %2013 = vmatprep.subr.mxu0 0.0
    %2014 = vmatpush1.msra.mxu0 0.0
    %2015 = vmatprep.subr.mxu0 0.0
    %2016 = vmatpush1.msra.mxu0 0.0
    %2017 = vmatprep.subr.mxu0 0.0
    %2018 = vmatpush1.msra.mxu0 %v1979
    %2019 = vmatprep.subr.mxu0 0.0
    %2020 = vmatpush1.msra.mxu0 %v1978
    %2021 = vmatprep.subr.mxu0 0.0
    %2022 = vmatpush1.msra.mxu0 %v1977
    %2023 = vmatprep.subr.mxu0 0.0
    %2024 = vmatpush1.msra.mxu0 %v1976
    %2025 = vmatprep.subr.mxu0 0.0
    %2026 = vmatpush2.msra.mxu0 0.0
    %2027 = vmatprep.subr.mxu0 0.0
    %2028 = vmatpush2.msra.mxu0 0.0
    %2029 = vmatprep.subr.mxu0 0.0
    %2030 = vmatpush2.msra.mxu0 0.0
    %2031 = vmatprep.subr.mxu0 0.0
    %2032 = vmatpush2.msra.mxu0 0.0
    %2033 = vmatprep.subr.mxu0 0.0
    %2034 = vmatpush2.msra.mxu0 0.0
    %2035 = vmatprep.subr.mxu0 0.0
    %2036 = vmatpush2.msra.mxu0 0.0
    %2037 = vmatprep.subr.mxu0 0.0
    %2038 = vmatpush2.msra.mxu0 0.0
    %2039 = vmatprep.subr.mxu0 0.0
    %2040 = vmatpush2.msra.mxu0 0.0
    %2041 = vmatprep.subr.mxu0 0.0
    %2042 = vmatpush2.msra.mxu0 0.0
    %2043 = vmatprep.subr.mxu0 0.0
    %2044 = vmatpush2.msra.mxu0 0.0
    %2045 = vmatprep.subr.mxu0 0.0
    %2046 = vmatpush2.msra.mxu0 0.0
    %2047 = vmatprep.subr.mxu0 0.0
    %2048 = vmatpush2.msra.mxu0 0.0
    %2049 = vmatprep.subr.mxu0 0.0
    %2050 = vmatpush2.msra.mxu0 0.0
    %2051 = vmatprep.subr.mxu0 0.0
    %2052 = vmatpush2.msra.mxu0 0.0
    %2053 = vmatprep.subr.mxu0 0.0
    %2054 = vmatpush2.msra.mxu0 0.0
    %2055 = vmatprep.subr.mxu0 0.0
    %2056 = vmatpush2.msra.mxu0 0.0
    %2057 = vmatprep.mubr.f32.mxu0 0.0
    %2058 = vmatmul.mubr.f32.gmra.mxu0 %v1988
    %v2059 = vpop.f32.mrf.mxu0
    %v2060 = vadd.f32 %v1985, %v2059
    %v2061 = vpop.f32.mrf.mxu0
    %2062 = vmatprep.mubr.f32.mxu0 0.0
    %2063 = vmatmul.mubr.f32.gmra.mxu0 %v1991
    %v2064 = vpop.f32.mrf.mxu0
    %v2065 = vadd.f32 %v1985, %v2064
    %v2066 = vpop.f32.mrf.mxu0
    %2067 = vdwg.mxu0
    %v2068 = vmul.f32 %v2060, 0.5
    %v2069 = vmul.f32 %v2065, 0.5
    %v2070 = vmul.f32 %v2060, 0.044715
    %v2071 = vmul.f32 %v2065, 0.044715
    %v2072 = vmul.f32 %v2070, %v2060
    %v2073 = vmul.f32 %v2071, %v2065
    %v2074 = vmul.f32 %v2072, %v2060
    %v2075 = vmul.f32 %v2073, %v2065
    %v2076 = vadd.f32 %v2060, %v2074
    %v2077 = vadd.f32 %v2065, %v2075
    %v2078 = vmul.f32 %v2076, 0.7978846
    %v2079 = vmul.f32 %v2077, 0.7978846
    %v2080 = vtanh.pop %v2078
    %v2081 = vtanh.pop %v2079
    %v2082 = vadd.f32 %v2080, 1.0
    %v2083 = vadd.f32 %v2081, 1.0
    %v2084 = vmul.f32 %v2068, %v2082
    %v2085 = vmul.f32 %v2069, %v2083
    %v2086 = vld [vmem:[#allocation16] sm:$0xff]
    %v2087 = vld [vmem:[#allocation16 + $0x8] sm:$0xff]
    %v2088 = vld [vmem:[#allocation16 + $0x10] sm:$0xff]
    %v2089 = vld [vmem:[#allocation16 + $0x18] sm:$0xff]
    %v2090 = vld [vmem:[%s13] sm:$0x1]
    %v2092 = vlaneseq
    %v2093 = vshrl.u32 %v2092, 7
    %v2094 = vsub.s32 0, %v2093
    %v2095 = vrot.slane %v2090, %v2094
    %v2098 = vsel %vm178, %v2084, 0
    %v2101 = vsel %vm178, %v2085, 0
    %2103 = vmatprep.subr.mxu0 0.0
    %2104 = vmatpush1.msra.mxu0 0.0
    %2105 = vmatprep.subr.mxu0 0.0
    %2106 = vmatpush1.msra.mxu0 0.0
    %2107 = vmatprep.subr.mxu0 0.0
    %2108 = vmatpush1.msra.mxu0 0.0
    %2109 = vmatprep.subr.mxu0 0.0
    %2110 = vmatpush1.msra.mxu0 0.0
    %2111 = vmatprep.subr.mxu0 0.0
    %2112 = vmatpush1.msra.mxu0 0.0
    %2113 = vmatprep.subr.mxu0 0.0
    %2114 = vmatpush1.msra.mxu0 0.0
    %2115 = vmatprep.subr.mxu0 0.0
    %2116 = vmatpush1.msra.mxu0 0.0
    %2117 = vmatprep.subr.mxu0 0.0
    %2118 = vmatpush1.msra.mxu0 0.0
    %2119 = vmatprep.subr.mxu0 0.0
    %2120 = vmatpush1.msra.mxu0 0.0
    %2121 = vmatprep.subr.mxu0 0.0
    %2122 = vmatpush1.msra.mxu0 0.0
    %2123 = vmatprep.subr.mxu0 0.0
    %2124 = vmatpush1.msra.mxu0 0.0
    %2125 = vmatprep.subr.mxu0 0.0
    %2126 = vmatpush1.msra.mxu0 0.0
    %2127 = vmatprep.subr.mxu0 0.0
    %2128 = vmatpush1.msra.mxu0 %v2089
    %2129 = vmatprep.subr.mxu0 0.0
    %2130 = vmatpush1.msra.mxu0 %v2088
    %2131 = vmatprep.subr.mxu0 0.0
    %2132 = vmatpush1.msra.mxu0 %v2087
    %2133 = vmatprep.subr.mxu0 0.0
    %2134 = vmatpush1.msra.mxu0 %v2086
    %2135 = vmatprep.subr.mxu0 0.0
    %2136 = vmatpush2.msra.mxu0 0.0
    %2137 = vmatprep.subr.mxu0 0.0
    %2138 = vmatpush2.msra.mxu0 0.0
    %2139 = vmatprep.subr.mxu0 0.0
    %2140 = vmatpush2.msra.mxu0 0.0
    %2141 = vmatprep.subr.mxu0 0.0
    %2142 = vmatpush2.msra.mxu0 0.0
    %2143 = vmatprep.subr.mxu0 0.0
    %2144 = vmatpush2.msra.mxu0 0.0
    %2145 = vmatprep.subr.mxu0 0.0
    %2146 = vmatpush2.msra.mxu0 0.0
    %2147 = vmatprep.subr.mxu0 0.0
    %2148 = vmatpush2.msra.mxu0 0.0
    %2149 = vmatprep.subr.mxu0 0.0
    %2150 = vmatpush2.msra.mxu0 0.0
    %2151 = vmatprep.subr.mxu0 0.0
    %2152 = vmatpush2.msra.mxu0 0.0
    %2153 = vmatprep.subr.mxu0 0.0
    %2154 = vmatpush2.msra.mxu0 0.0
    %2155 = vmatprep.subr.mxu0 0.0
    %2156 = vmatpush2.msra.mxu0 0.0
    %2157 = vmatprep.subr.mxu0 0.0
    %2158 = vmatpush2.msra.mxu0 0.0
    %2159 = vmatprep.subr.mxu0 0.0
    %2160 = vmatpush2.msra.mxu0 0.0
    %2161 = vmatprep.subr.mxu0 0.0
    %2162 = vmatpush2.msra.mxu0 0.0
    %2163 = vmatprep.subr.mxu0 0.0
    %2164 = vmatpush2.msra.mxu0 0.0
    %2165 = vmatprep.subr.mxu0 0.0
    %2166 = vmatpush2.msra.mxu0 0.0
    %2167 = vmatprep.mubr.f32.mxu0 0.0
    %2168 = vmatmul.mubr.f32.gmra.mxu0 %v2098
    %v2169 = vpop.f32.mrf.mxu0
    %v2170 = vadd.f32 %v2095, %v2169
    %v2171 = vpop.f32.mrf.mxu0
    %2172 = vmatprep.mubr.f32.mxu0 0.0
    %2173 = vmatmul.mubr.f32.gmra.mxu0 %v2101
    %v2174 = vpop.f32.mrf.mxu0
    %v2175 = vadd.f32 %v2095, %v2174
    %v2176 = vpop.f32.mrf.mxu0
    %2177 = vdwg.mxu0
    %v2178 = vadd.f32 %v2170, %v1974
    %v2179 = vadd.f32 %v2175, %v1975
    %v2182 = vrot.slane %v2179, 7
    %vm2183 = vcmask 1041409
    %v2184 = vsel %vm2183, %v2182, %v2178
    %v2186 = vrot.slane %v2178, 1
    %v2187 = vsel %vm2183, %v2179, %v2186
    %2188 = vrot.lane.b32.xlu0 %v2187, 32
    %v2189 = vpop.permute.xlu0 %2188
    %v2191 = vrot.slane %v2178, 2
    %v2192 = vrot.slane %v2179, 1
    %v2193 = vsel %vm2183, %v2192, %v2191
    %2194 = vrot.lane.b32.xlu0 %v2193, 64
    %v2195 = vpop.permute.xlu0 %2194
    %v2197 = vrot.slane %v2178, 3
    %v2198 = vrot.slane %v2179, 2
    %v2199 = vsel %vm2183, %v2198, %v2197
    %2200 = vrot.lane.b32.xlu0 %v2199, 96
    %v2201 = vpop.permute.xlu0 %2200
    %v2203 = vrot.slane %v2178, 4
    %v2204 = vrot.slane %v2179, 3
    %v2205 = vsel %vm2183, %v2204, %v2203
    %v2207 = vrot.slane %v2178, 5
    %v2208 = vrot.slane %v2179, 4
    %v2209 = vsel %vm2183, %v2208, %v2207
    %2210 = vrot.lane.b32.xlu0 %v2209, 32
    %v2211 = vpop.permute.xlu0 %2210
    %v2213 = vrot.slane %v2178, 6
    %v2214 = vrot.slane %v2179, 5
    %v2215 = vsel %vm2183, %v2214, %v2213
    %2216 = vrot.lane.b32.xlu0 %v2215, 64
    %v2217 = vpop.permute.xlu0 %2216
    %v2219 = vrot.slane %v2178, 7
    %v2220 = vrot.slane %v2179, 6
    %v2221 = vsel %vm2183, %v2220, %v2219
    %2222 = vrot.lane.b32.xlu0 %v2221, 96
    %v2223 = vpop.permute.xlu0 %2222
    %v2225 = vsel %vm178, %v2184, %v2189
    %vm2226 = vcmask 523264
    %v2227 = vsel %vm2226, %v2225, %v2195
    %vm2228 = vcmask 785408
    %v2229 = vsel %vm2228, %v2227, %v2201
    %v2230 = vsel %vm178, %v2205, %v2211
    %v2231 = vsel %vm2226, %v2230, %v2217
    %v2232 = vsel %vm2228, %v2231, %v2223
    %v2235 = vcombine.low %v2229, %v2232
    %v2237 = vunpack.c.l.s4 1983009808
    %v2238 = vunpack.c.0.s8 %v2237
    %v2239 = vlaneseq
    %v2240 = vshrl.u32 %v2239, 7
    %v2241 = vsub.s32 %v2238, %v2240
    %v2242 = vrot.slane %v2235, %v2241
    %2244 = vst [vmem:[#allocation17] sm:$0xf] %v2242
    // Predicated region
    $region94: #{tpu_custom_call.1} parent=1 // pred_check
      _
    $region95: #{tpu_custom_call.1} parent=1 // pred_check_branch
      %2246 = sbr.rel (0) target = $region97
    $region96: #{tpu_custom_call.1} parent=1 // pred_region
      %s2248 = ssub.s32 64, 64
      %2249 = vsyncadd [#allocation4], %s2248
      %s2251 = sshll.u32 [#allocation17], 4
      %s2252 = int_to_ptr.vmem [resolvable:$true] %s2251
      %2254 = dma.vmem_to_hbm [thread:$0]  %s2252, 64, %s14, [#allocation4]
    $region97: #{tpu_custom_call.1} parent=1 // pred_fallthru
      _
    // Predicated region
    $region98: #{tpu_custom_call.1} parent=1 // pred_check
      _
    $region99: #{tpu_custom_call.1} parent=1 // pred_check_branch
      %2256 = sbr.rel (0) target = $region101
    $region100: #{tpu_custom_call.1} parent=1 // pred_region
      %2257 = dma.done [#allocation4], 64
    $region101: #{tpu_custom_call.1} parent=1 // pred_fallthru
      _
    %2258 = vsyncpa [#allocation3], 1
    %2259 = vsyncpa [#allocation6], 1
    %2260 = vsyncpa [#allocation9], 1
    %2261 = vsyncpa [#allocation12], 1
    %2262 = vsyncpa [#allocation15], 1
    %2263 = vsyncpa [#allocation4], 1

</llo_original>
